<compile_context>
chip_gen: v5e
topology: v5e:2x2
jax: 0.10.0
libtpu: 0.0.40
codegen_flags: <defaults>
</compile_context>

<pallas_src>
import functools
import math

import jax
import jax.numpy as jnp
import numpy as np
from jax.experimental import pallas as pl
from jax.experimental.pallas import tpu as pltpu

_M31 = (1 << 31) - 1  # Mersenne prime 2^31 - 1


def _polyhash_kernel(cs_ref, x_ref, o_ref, *, num_hashes: int, out_range: int):
    # cs_ref: (num_hashes,) int32 in SMEM (scalar prefetch), values in [1, 2^30)
    # x_ref : (bn, lanes)  int32, non-negative ids
    # o_ref : (num_hashes, bn, lanes) int32
    m = jnp.int32(_M31)
    x = x_ref[...]
    # x in [0, 2^31-1]; reduce mod M (only x == M wraps to 0).
    a = jnp.where(x == m, jnp.int32(0), x)
    a1 = a >> 16                       # < 2^15
    a0 = a & jnp.int32(0xFFFF)         # < 2^16
    r = jnp.int32(out_range)

    def addmod(u, v):
        # u, v in [0, M) -> (u + v) mod M, without int32 overflow.
        s = u - (m - v)
        return jnp.where(s < 0, s + m, s)

    # num_hashes is small & static -> unrolled; all VPU shift/add/mul work.
    for h in range(num_hashes):
        c = cs_ref[h]                  # scalar, < 2^30
        c1 = c >> 15                   # < 2^15
        c0 = c & 0x7FFF                # < 2^15
        # a*c = a1*c1*2^31 + a1*c0*2^16 + a0*c1*2^15 + a0*c0 ; 2^31 === 1 mod M.
        t_a = a1 * c1                                    # < 2^30  (< M)
        t_b = a1 * c0                                    # < 2^30
        term_b = (t_b >> 15) + ((t_b & 0x7FFF) << 16)    # === t_b*2^16 mod M, < M
        t_c = a0 * c1                                    # < 2^31
        term_c = (t_c >> 16) + ((t_c & 0xFFFF) << 15)    # === t_c*2^15 mod M, < M
        term_d = a0 * c0                                 # < M
        mm = addmod(addmod(t_a, term_b), addmod(term_c, term_d))  # (x*c) mod M
        o_ref[h] = mm % r              # single int division per hash


def polyhash(x: jax.Array, cs: jax.Array, output_range: int, *, interpret: bool = False):
    """PolyHash forward: returns int32 array of shape x.shape + (num_hashes,)."""
    assert output_range <= _M31, "Must be less than the Mersenne 2^31-1"
    orig_shape = x.shape
    num_hashes = int(cs.shape[0])
    total = int(math.prod(orig_shape))

    # ---- pick a lane-dense 2-D view and a VMEM-budgeted row tile ----------
    lanes = 512 if total >= 512 * 16 else 128
    rows = -(-total // lanes)
    rows8 = -(-rows // 8) * 8

    budget_bytes = 12 * 1024 * 1024           # double-buffered in+out, v7x-safe
    per_row_bytes = 2 * (1 + num_hashes) * lanes * 4
    bn = max(8, min(2048, (budget_bytes // per_row_bytes) // 8 * 8))
    bn = min(bn, rows8)
    if rows8 >= 16:
        # keep >=2 grid steps so both v7x TensorCores get work
        half = -(-((rows8 + 1) // 2) // 8) * 8
        bn = max(8, min(bn, half))
    padded_rows = -(-rows // bn) * bn
    grid = padded_rows // bn

    # ---- pad + reshape input (int32 ids; padding hashes are discarded) ----
    flat = x.reshape(-1).astype(jnp.int32)
    pad = padded_rows * lanes - total
    if pad:
        flat = jnp.pad(flat, (0, pad))
    x2d = flat.reshape(padded_rows, lanes)
    cs32 = cs.astype(jnp.int32)

    kernel = functools.partial(
        _polyhash_kernel, num_hashes=num_hashes, out_range=int(output_range)
    )

    out_hnd = pl.pallas_call(
        kernel,
        out_shape=jax.ShapeDtypeStruct((num_hashes, padded_rows, lanes), jnp.int32),
        grid_spec=pltpu.PrefetchScalarGridSpec(
            num_scalar_prefetch=1,                       # cs -> SMEM
            grid=(grid,),
            in_specs=[pl.BlockSpec((bn, lanes), lambda i, cs_ref: (i, 0))],
            out_specs=pl.BlockSpec(
                (num_hashes, bn, lanes), lambda i, cs_ref: (0, i, 0)
            ),
        ),
        compiler_params=pltpu.CompilerParams(
            dimension_semantics=("parallel",),
            vmem_limit_bytes=32 * 1024 * 1024,
        ),
        cost_estimate=pl.CostEstimate(
            flops=16 * total * num_hashes,
            transcendentals=0,
            bytes_accessed=4 * total * (1 + num_hashes),
        ),
        interpret=interpret,
    )(cs32, x2d)

    # [H, rows, lanes] -> torch layout x.shape + (H,).  This is one XLA
    # relayout pass (~a second HBM sweep); skip it if the consumer can take
    # the hash-major [H, ...] layout directly.
    out_flat = out_hnd.reshape(num_hashes, padded_rows * lanes)[:, :total]
    return jnp.transpose(out_flat, (1, 0)).reshape(*orig_shape, num_hashes)


def polyhash_ref(x_np, cs_np, output_range):
    # Exact torch semantics for non-negative ids (exact int64 product).
    x64 = np.asarray(x_np, dtype=np.int64)[..., None] * np.asarray(cs_np, dtype=np.int64)
    return (x64 % _M31) % output_range


if __name__ == "__main__":
    num_hashes = 4
    output_range = 1000

    key = jax.random.PRNGKey(0)
    k_x, k_c = jax.random.split(key)
    # small id tensor: batch=8, seq=1024 token ids
    x = jax.random.randint(
        k_x, (8, 1024), minval=0, maxval=2**31 - 1, dtype=jnp.int32
    )
    # matches torch.randint(1, 1 << 31 - 1) == randint(1, 2**30)
    cs = jax.random.randint(
        k_c, (num_hashes,), minval=1, maxval=1 << 30, dtype=jnp.int32
    )

    out = polyhash(x, cs, output_range)
    out = jax.block_until_ready(out)

    ref = polyhash_ref(np.asarray(x), np.asarray(cs), output_range)
    assert out.shape == (8, 1024, num_hashes), out.shape
    assert out.dtype == jnp.int32
    assert np.array_equal(np.asarray(out), ref)

    print("KERNEL_OK")
</pallas_src>

<mosaic_0001>
module attributes {stable_mosaic.version = 11 : i64} {
  func.func @_polyhash_kernel(%arg0: i32, %arg1: memref<4xi32, #tpu.memory_space<smem>>, %arg2: memref<8x512xi32, #tpu.memory_space<vmem>>, %arg3: memref<4x8x512xi32, #tpu.memory_space<vmem>>) attributes {dimension_semantics = [#tpu.dimension_semantics<parallel>], iteration_bounds = array<i64: 2>, scalar_prefetch = 1 : i64, scratch_operands = 0 : i64, tpu.core_type = #tpu.core_type<tc>, window_params = [{transform_indices = @transform_0, window_bounds = array<i64: 8, 512>}, {transform_indices = @transform_1, window_bounds = array<i64: 4, 8, 512>}]} {
    %c0 = arith.constant 0 : index
    %c0_0 = arith.constant 0 : index
    %0 = vector.load %arg2[%c0, %c0_0] : memref<8x512xi32, #tpu.memory_space<vmem>>, vector<8x512xi32>
    %c2147483647_i32 = arith.constant 2147483647 : i32
    %1 = vector.broadcast %c2147483647_i32 : i32 to vector<8x512xi32>
    %2 = arith.cmpi eq, %0, %1 : vector<8x512xi32>
    %c0_i32 = arith.constant 0 : i32
    %3 = vector.broadcast %c0_i32 : i32 to vector<8x512xi32>
    %4 = arith.select %2, %3, %0 : vector<8x512xi1>, vector<8x512xi32>
    %c16_i32 = arith.constant 16 : i32
    %5 = vector.broadcast %c16_i32 : i32 to vector<8x512xi32>
    %6 = arith.shrsi %4, %5 : vector<8x512xi32>
    %c65535_i32 = arith.constant 65535 : i32
    %7 = vector.broadcast %c65535_i32 : i32 to vector<8x512xi32>
    %8 = arith.andi %4, %7 : vector<8x512xi32>
    %c0_1 = arith.constant 0 : index
    %9 = memref.load %arg1[%c0_1] : memref<4xi32, #tpu.memory_space<smem>>
    %c15_i32 = arith.constant 15 : i32
    %10 = arith.shrsi %9, %c15_i32 : i32
    %c32767_i32 = arith.constant 32767 : i32
    %11 = arith.andi %9, %c32767_i32 : i32
    %12 = vector.broadcast %10 : i32 to vector<8x512xi32>
    %13 = arith.muli %6, %12 : vector<8x512xi32>
    %14 = vector.broadcast %11 : i32 to vector<8x512xi32>
    %15 = arith.muli %6, %14 : vector<8x512xi32>
    %c15_i32_2 = arith.constant 15 : i32
    %16 = vector.broadcast %c15_i32_2 : i32 to vector<8x512xi32>
    %17 = arith.shrsi %15, %16 : vector<8x512xi32>
    %c32767_i32_3 = arith.constant 32767 : i32
    %18 = vector.broadcast %c32767_i32_3 : i32 to vector<8x512xi32>
    %19 = arith.andi %15, %18 : vector<8x512xi32>
    %c16_i32_4 = arith.constant 16 : i32
    %20 = vector.broadcast %c16_i32_4 : i32 to vector<8x512xi32>
    %21 = arith.shli %19, %20 : vector<8x512xi32>
    %22 = arith.addi %17, %21 : vector<8x512xi32>
    %23 = vector.broadcast %10 : i32 to vector<8x512xi32>
    %24 = arith.muli %8, %23 : vector<8x512xi32>
    %c16_i32_5 = arith.constant 16 : i32
    %25 = vector.broadcast %c16_i32_5 : i32 to vector<8x512xi32>
    %26 = arith.shrsi %24, %25 : vector<8x512xi32>
    %c65535_i32_6 = arith.constant 65535 : i32
    %27 = vector.broadcast %c65535_i32_6 : i32 to vector<8x512xi32>
    %28 = arith.andi %24, %27 : vector<8x512xi32>
    %c15_i32_7 = arith.constant 15 : i32
    %29 = vector.broadcast %c15_i32_7 : i32 to vector<8x512xi32>
    %30 = arith.shli %28, %29 : vector<8x512xi32>
    %31 = arith.addi %26, %30 : vector<8x512xi32>
    %32 = vector.broadcast %11 : i32 to vector<8x512xi32>
    %33 = arith.muli %8, %32 : vector<8x512xi32>
    %c2147483647_i32_8 = arith.constant 2147483647 : i32
    %34 = vector.broadcast %c2147483647_i32_8 : i32 to vector<8x512xi32>
    %35 = arith.subi %34, %22 : vector<8x512xi32>
    %36 = arith.subi %13, %35 : vector<8x512xi32>
    %c0_i32_9 = arith.constant 0 : i32
    %37 = vector.broadcast %c0_i32_9 : i32 to vector<8x512xi32>
    %38 = arith.cmpi slt, %36, %37 : vector<8x512xi32>
    %c2147483647_i32_10 = arith.constant 2147483647 : i32
    %39 = vector.broadcast %c2147483647_i32_10 : i32 to vector<8x512xi32>
    %40 = arith.addi %36, %39 : vector<8x512xi32>
    %41 = arith.select %38, %40, %36 : vector<8x512xi1>, vector<8x512xi32>
    %c2147483647_i32_11 = arith.constant 2147483647 : i32
    %42 = vector.broadcast %c2147483647_i32_11 : i32 to vector<8x512xi32>
    %43 = arith.subi %42, %33 : vector<8x512xi32>
    %44 = arith.subi %31, %43 : vector<8x512xi32>
    %c0_i32_12 = arith.constant 0 : i32
    %45 = vector.broadcast %c0_i32_12 : i32 to vector<8x512xi32>
    %46 = arith.cmpi slt, %44, %45 : vector<8x512xi32>
    %c2147483647_i32_13 = arith.constant 2147483647 : i32
    %47 = vector.broadcast %c2147483647_i32_13 : i32 to vector<8x512xi32>
    %48 = arith.addi %44, %47 : vector<8x512xi32>
    %49 = arith.select %46, %48, %44 : vector<8x512xi1>, vector<8x512xi32>
    %c2147483647_i32_14 = arith.constant 2147483647 : i32
    %50 = vector.broadcast %c2147483647_i32_14 : i32 to vector<8x512xi32>
    %51 = arith.subi %50, %49 : vector<8x512xi32>
    %52 = arith.subi %41, %51 : vector<8x512xi32>
    %c0_i32_15 = arith.constant 0 : i32
    %53 = vector.broadcast %c0_i32_15 : i32 to vector<8x512xi32>
    %54 = arith.cmpi slt, %52, %53 : vector<8x512xi32>
    %c2147483647_i32_16 = arith.constant 2147483647 : i32
    %55 = vector.broadcast %c2147483647_i32_16 : i32 to vector<8x512xi32>
    %56 = arith.addi %52, %55 : vector<8x512xi32>
    %57 = arith.select %54, %56, %52 : vector<8x512xi1>, vector<8x512xi32>
    %c1000_i32 = arith.constant 1000 : i32
    %c0_i32_17 = arith.constant 0 : i32
    %58 = arith.cmpi eq, %c1000_i32, %c0_i32_17 : i32
    %c1_i32 = arith.constant 1 : i32
    %59 = arith.select %58, %c1_i32, %c1000_i32 : i32
    %60 = vector.broadcast %59 : i32 to vector<8x512xi32>
    %61 = arith.remsi %57, %60 : vector<8x512xi32>
    %c0_i32_18 = arith.constant 0 : i32
    %62 = vector.broadcast %c0_i32_18 : i32 to vector<8x512xi32>
    %63 = arith.cmpi ne, %61, %62 : vector<8x512xi32>
    %c0_i32_19 = arith.constant 0 : i32
    %64 = vector.broadcast %c0_i32_19 : i32 to vector<8x512xi32>
    %65 = arith.cmpi slt, %61, %64 : vector<8x512xi32>
    %c0_i32_20 = arith.constant 0 : i32
    %66 = arith.cmpi slt, %59, %c0_i32_20 : i32
    %67 = vector.broadcast %66 : i1 to vector<8x512xi1>
    %68 = vector.broadcast %67 : vector<8x512xi1> to vector<8x512xi1>
    %69 = arith.xori %65, %68 : vector<8x512xi1>
    %70 = arith.andi %69, %63 : vector<8x512xi1>
    %71 = vector.broadcast %59 : i32 to vector<8x512xi32>
    %72 = arith.addi %61, %71 : vector<8x512xi32>
    %73 = arith.select %70, %72, %61 : vector<8x512xi1>, vector<8x512xi32>
    %c0_21 = arith.constant 0 : index
    %c0_22 = arith.constant 0 : index
    %c0_23 = arith.constant 0 : index
    %74 = vector.load %arg3[%c0_21, %c0_22, %c0_23] : memref<4x8x512xi32, #tpu.memory_space<vmem>>, vector<1x8x512xi32>
    %75 = vector.shape_cast %74 : vector<1x8x512xi32> to vector<8x512xi32>
    %76 = vector.shape_cast %73 : vector<8x512xi32> to vector<1x8x512xi32>
    tpu.vector_store %arg3[%c0_21, %c0_22, %c0_23], %76 {strides = array<i32>} : memref<4x8x512xi32, #tpu.memory_space<vmem>>, vector<1x8x512xi32>,
    %c1 = arith.constant 1 : index
    %77 = memref.load %arg1[%c1] : memref<4xi32, #tpu.memory_space<smem>>
    %c15_i32_24 = arith.constant 15 : i32
    %78 = arith.shrsi %77, %c15_i32_24 : i32
    %c32767_i32_25 = arith.constant 32767 : i32
    %79 = arith.andi %77, %c32767_i32_25 : i32
    %80 = vector.broadcast %78 : i32 to vector<8x512xi32>
    %81 = arith.muli %6, %80 : vector<8x512xi32>
    %82 = vector.broadcast %79 : i32 to vector<8x512xi32>
    %83 = arith.muli %6, %82 : vector<8x512xi32>
    %c15_i32_26 = arith.constant 15 : i32
    %84 = vector.broadcast %c15_i32_26 : i32 to vector<8x512xi32>
    %85 = arith.shrsi %83, %84 : vector<8x512xi32>
    %c32767_i32_27 = arith.constant 32767 : i32
    %86 = vector.broadcast %c32767_i32_27 : i32 to vector<8x512xi32>
    %87 = arith.andi %83, %86 : vector<8x512xi32>
    %c16_i32_28 = arith.constant 16 : i32
    %88 = vector.broadcast %c16_i32_28 : i32 to vector<8x512xi32>
    %89 = arith.shli %87, %88 : vector<8x512xi32>
    %90 = arith.addi %85, %89 : vector<8x512xi32>
    %91 = vector.broadcast %78 : i32 to vector<8x512xi32>
    %92 = arith.muli %8, %91 : vector<8x512xi32>
    %c16_i32_29 = arith.constant 16 : i32
    %93 = vector.broadcast %c16_i32_29 : i32 to vector<8x512xi32>
    %94 = arith.shrsi %92, %93 : vector<8x512xi32>
    %c65535_i32_30 = arith.constant 65535 : i32
    %95 = vector.broadcast %c65535_i32_30 : i32 to vector<8x512xi32>
    %96 = arith.andi %92, %95 : vector<8x512xi32>
    %c15_i32_31 = arith.constant 15 : i32
    %97 = vector.broadcast %c15_i32_31 : i32 to vector<8x512xi32>
    %98 = arith.shli %96, %97 : vector<8x512xi32>
    %99 = arith.addi %94, %98 : vector<8x512xi32>
    %100 = vector.broadcast %79 : i32 to vector<8x512xi32>
    %101 = arith.muli %8, %100 : vector<8x512xi32>
    %c2147483647_i32_32 = arith.constant 2147483647 : i32
    %102 = vector.broadcast %c2147483647_i32_32 : i32 to vector<8x512xi32>
    %103 = arith.subi %102, %90 : vector<8x512xi32>
    %104 = arith.subi %81, %103 : vector<8x512xi32>
    %c0_i32_33 = arith.constant 0 : i32
    %105 = vector.broadcast %c0_i32_33 : i32 to vector<8x512xi32>
    %106 = arith.cmpi slt, %104, %105 : vector<8x512xi32>
    %c2147483647_i32_34 = arith.constant 2147483647 : i32
    %107 = vector.broadcast %c2147483647_i32_34 : i32 to vector<8x512xi32>
    %108 = arith.addi %104, %107 : vector<8x512xi32>
    %109 = arith.select %106, %108, %104 : vector<8x512xi1>, vector<8x512xi32>
    %c2147483647_i32_35 = arith.constant 2147483647 : i32
    %110 = vector.broadcast %c2147483647_i32_35 : i32 to vector<8x512xi32>
    %111 = arith.subi %110, %101 : vector<8x512xi32>
    %112 = arith.subi %99, %111 : vector<8x512xi32>
    %c0_i32_36 = arith.constant 0 : i32
    %113 = vector.broadcast %c0_i32_36 : i32 to vector<8x512xi32>
    %114 = arith.cmpi slt, %112, %113 : vector<8x512xi32>
    %c2147483647_i32_37 = arith.constant 2147483647 : i32
    %115 = vector.broadcast %c2147483647_i32_37 : i32 to vector<8x512xi32>
    %116 = arith.addi %112, %115 : vector<8x512xi32>
    %117 = arith.select %114, %116, %112 : vector<8x512xi1>, vector<8x512xi32>
    %c2147483647_i32_38 = arith.constant 2147483647 : i32
    %118 = vector.broadcast %c2147483647_i32_38 : i32 to vector<8x512xi32>
    %119 = arith.subi %118, %117 : vector<8x512xi32>
    %120 = arith.subi %109, %119 : vector<8x512xi32>
    %c0_i32_39 = arith.constant 0 : i32
    %121 = vector.broadcast %c0_i32_39 : i32 to vector<8x512xi32>
    %122 = arith.cmpi slt, %120, %121 : vector<8x512xi32>
    %c2147483647_i32_40 = arith.constant 2147483647 : i32
    %123 = vector.broadcast %c2147483647_i32_40 : i32 to vector<8x512xi32>
    %124 = arith.addi %120, %123 : vector<8x512xi32>
    %125 = arith.select %122, %124, %120 : vector<8x512xi1>, vector<8x512xi32>
    %c1000_i32_41 = arith.constant 1000 : i32
    %c0_i32_42 = arith.constant 0 : i32
    %126 = arith.cmpi eq, %c1000_i32_41, %c0_i32_42 : i32
    %c1_i32_43 = arith.constant 1 : i32
    %127 = arith.select %126, %c1_i32_43, %c1000_i32_41 : i32
    %128 = vector.broadcast %127 : i32 to vector<8x512xi32>
    %129 = arith.remsi %125, %128 : vector<8x512xi32>
    %c0_i32_44 = arith.constant 0 : i32
    %130 = vector.broadcast %c0_i32_44 : i32 to vector<8x512xi32>
    %131 = arith.cmpi ne, %129, %130 : vector<8x512xi32>
    %c0_i32_45 = arith.constant 0 : i32
    %132 = vector.broadcast %c0_i32_45 : i32 to vector<8x512xi32>
    %133 = arith.cmpi slt, %129, %132 : vector<8x512xi32>
    %c0_i32_46 = arith.constant 0 : i32
    %134 = arith.cmpi slt, %127, %c0_i32_46 : i32
    %135 = vector.broadcast %134 : i1 to vector<8x512xi1>
    %136 = vector.broadcast %135 : vector<8x512xi1> to vector<8x512xi1>
    %137 = arith.xori %133, %136 : vector<8x512xi1>
    %138 = arith.andi %137, %131 : vector<8x512xi1>
    %139 = vector.broadcast %127 : i32 to vector<8x512xi32>
    %140 = arith.addi %129, %139 : vector<8x512xi32>
    %141 = arith.select %138, %140, %129 : vector<8x512xi1>, vector<8x512xi32>
    %c1_47 = arith.constant 1 : index
    %c0_48 = arith.constant 0 : index
    %c0_49 = arith.constant 0 : index
    %142 = vector.load %arg3[%c1_47, %c0_48, %c0_49] : memref<4x8x512xi32, #tpu.memory_space<vmem>>, vector<1x8x512xi32>
    %143 = vector.shape_cast %142 : vector<1x8x512xi32> to vector<8x512xi32>
    %144 = vector.shape_cast %141 : vector<8x512xi32> to vector<1x8x512xi32>
    tpu.vector_store %arg3[%c1_47, %c0_48, %c0_49], %144 {strides = array<i32>} : memref<4x8x512xi32, #tpu.memory_space<vmem>>, vector<1x8x512xi32>,
    %c2 = arith.constant 2 : index
    %145 = memref.load %arg1[%c2] : memref<4xi32, #tpu.memory_space<smem>>
    %c15_i32_50 = arith.constant 15 : i32
    %146 = arith.shrsi %145, %c15_i32_50 : i32
    %c32767_i32_51 = arith.constant 32767 : i32
    %147 = arith.andi %145, %c32767_i32_51 : i32
    %148 = vector.broadcast %146 : i32 to vector<8x512xi32>
    %149 = arith.muli %6, %148 : vector<8x512xi32>
    %150 = vector.broadcast %147 : i32 to vector<8x512xi32>
    %151 = arith.muli %6, %150 : vector<8x512xi32>
    %c15_i32_52 = arith.constant 15 : i32
    %152 = vector.broadcast %c15_i32_52 : i32 to vector<8x512xi32>
    %153 = arith.shrsi %151, %152 : vector<8x512xi32>
    %c32767_i32_53 = arith.constant 32767 : i32
    %154 = vector.broadcast %c32767_i32_53 : i32 to vector<8x512xi32>
    %155 = arith.andi %151, %154 : vector<8x512xi32>
    %c16_i32_54 = arith.constant 16 : i32
    %156 = vector.broadcast %c16_i32_54 : i32 to vector<8x512xi32>
    %157 = arith.shli %155, %156 : vector<8x512xi32>
    %158 = arith.addi %153, %157 : vector<8x512xi32>
    %159 = vector.broadcast %146 : i32 to vector<8x512xi32>
    %160 = arith.muli %8, %159 : vector<8x512xi32>
    %c16_i32_55 = arith.constant 16 : i32
    %161 = vector.broadcast %c16_i32_55 : i32 to vector<8x512xi32>
    %162 = arith.shrsi %160, %161 : vector<8x512xi32>
    %c65535_i32_56 = arith.constant 65535 : i32
    %163 = vector.broadcast %c65535_i32_56 : i32 to vector<8x512xi32>
    %164 = arith.andi %160, %163 : vector<8x512xi32>
    %c15_i32_57 = arith.constant 15 : i32
    %165 = vector.broadcast %c15_i32_57 : i32 to vector<8x512xi32>
    %166 = arith.shli %164, %165 : vector<8x512xi32>
    %167 = arith.addi %162, %166 : vector<8x512xi32>
    %168 = vector.broadcast %147 : i32 to vector<8x512xi32>
    %169 = arith.muli %8, %168 : vector<8x512xi32>
    %c2147483647_i32_58 = arith.constant 2147483647 : i32
    %170 = vector.broadcast %c2147483647_i32_58 : i32 to vector<8x512xi32>
    %171 = arith.subi %170, %158 : vector<8x512xi32>
    %172 = arith.subi %149, %171 : vector<8x512xi32>
    %c0_i32_59 = arith.constant 0 : i32
    %173 = vector.broadcast %c0_i32_59 : i32 to vector<8x512xi32>
    %174 = arith.cmpi slt, %172, %173 : vector<8x512xi32>
    %c2147483647_i32_60 = arith.constant 2147483647 : i32
    %175 = vector.broadcast %c2147483647_i32_60 : i32 to vector<8x512xi32>
    %176 = arith.addi %172, %175 : vector<8x512xi32>
    %177 = arith.select %174, %176, %172 : vector<8x512xi1>, vector<8x512xi32>
    %c2147483647_i32_61 = arith.constant 2147483647 : i32
    %178 = vector.broadcast %c2147483647_i32_61 : i32 to vector<8x512xi32>
    %179 = arith.subi %178, %169 : vector<8x512xi32>
    %180 = arith.subi %167, %179 : vector<8x512xi32>
    %c0_i32_62 = arith.constant 0 : i32
    %181 = vector.broadcast %c0_i32_62 : i32 to vector<8x512xi32>
    %182 = arith.cmpi slt, %180, %181 : vector<8x512xi32>
    %c2147483647_i32_63 = arith.constant 2147483647 : i32
    %183 = vector.broadcast %c2147483647_i32_63 : i32 to vector<8x512xi32>
    %184 = arith.addi %180, %183 : vector<8x512xi32>
    %185 = arith.select %182, %184, %180 : vector<8x512xi1>, vector<8x512xi32>
    %c2147483647_i32_64 = arith.constant 2147483647 : i32
    %186 = vector.broadcast %c2147483647_i32_64 : i32 to vector<8x512xi32>
    %187 = arith.subi %186, %185 : vector<8x512xi32>
    %188 = arith.subi %177, %187 : vector<8x512xi32>
    %c0_i32_65 = arith.constant 0 : i32
    %189 = vector.broadcast %c0_i32_65 : i32 to vector<8x512xi32>
    %190 = arith.cmpi slt, %188, %189 : vector<8x512xi32>
    %c2147483647_i32_66 = arith.constant 2147483647 : i32
    %191 = vector.broadcast %c2147483647_i32_66 : i32 to vector<8x512xi32>
    %192 = arith.addi %188, %191 : vector<8x512xi32>
    %193 = arith.select %190, %192, %188 : vector<8x512xi1>, vector<8x512xi32>
    %c1000_i32_67 = arith.constant 1000 : i32
    %c0_i32_68 = arith.constant 0 : i32
    %194 = arith.cmpi eq, %c1000_i32_67, %c0_i32_68 : i32
    %c1_i32_69 = arith.constant 1 : i32
    %195 = arith.select %194, %c1_i32_69, %c1000_i32_67 : i32
    %196 = vector.broadcast %195 : i32 to vector<8x512xi32>
    %197 = arith.remsi %193, %196 : vector<8x512xi32>
    %c0_i32_70 = arith.constant 0 : i32
    %198 = vector.broadcast %c0_i32_70 : i32 to vector<8x512xi32>
    %199 = arith.cmpi ne, %197, %198 : vector<8x512xi32>
    %c0_i32_71 = arith.constant 0 : i32
    %200 = vector.broadcast %c0_i32_71 : i32 to vector<8x512xi32>
    %201 = arith.cmpi slt, %197, %200 : vector<8x512xi32>
    %c0_i32_72 = arith.constant 0 : i32
    %202 = arith.cmpi slt, %195, %c0_i32_72 : i32
    %203 = vector.broadcast %202 : i1 to vector<8x512xi1>
    %204 = vector.broadcast %203 : vector<8x512xi1> to vector<8x512xi1>
    %205 = arith.xori %201, %204 : vector<8x512xi1>
    %206 = arith.andi %205, %199 : vector<8x512xi1>
    %207 = vector.broadcast %195 : i32 to vector<8x512xi32>
    %208 = arith.addi %197, %207 : vector<8x512xi32>
    %209 = arith.select %206, %208, %197 : vector<8x512xi1>, vector<8x512xi32>
    %c2_73 = arith.constant 2 : index
    %c0_74 = arith.constant 0 : index
    %c0_75 = arith.constant 0 : index
    %210 = vector.load %arg3[%c2_73, %c0_74, %c0_75] : memref<4x8x512xi32, #tpu.memory_space<vmem>>, vector<1x8x512xi32>
    %211 = vector.shape_cast %210 : vector<1x8x512xi32> to vector<8x512xi32>
    %212 = vector.shape_cast %209 : vector<8x512xi32> to vector<1x8x512xi32>
    tpu.vector_store %arg3[%c2_73, %c0_74, %c0_75], %212 {strides = array<i32>} : memref<4x8x512xi32, #tpu.memory_space<vmem>>, vector<1x8x512xi32>,
    %c3 = arith.constant 3 : index
    %213 = memref.load %arg1[%c3] : memref<4xi32, #tpu.memory_space<smem>>
    %c15_i32_76 = arith.constant 15 : i32
    %214 = arith.shrsi %213, %c15_i32_76 : i32
    %c32767_i32_77 = arith.constant 32767 : i32
    %215 = arith.andi %213, %c32767_i32_77 : i32
    %216 = vector.broadcast %214 : i32 to vector<8x512xi32>
    %217 = arith.muli %6, %216 : vector<8x512xi32>
    %218 = vector.broadcast %215 : i32 to vector<8x512xi32>
    %219 = arith.muli %6, %218 : vector<8x512xi32>
    %c15_i32_78 = arith.constant 15 : i32
    %220 = vector.broadcast %c15_i32_78 : i32 to vector<8x512xi32>
    %221 = arith.shrsi %219, %220 : vector<8x512xi32>
    %c32767_i32_79 = arith.constant 32767 : i32
    %222 = vector.broadcast %c32767_i32_79 : i32 to vector<8x512xi32>
    %223 = arith.andi %219, %222 : vector<8x512xi32>
    %c16_i32_80 = arith.constant 16 : i32
    %224 = vector.broadcast %c16_i32_80 : i32 to vector<8x512xi32>
    %225 = arith.shli %223, %224 : vector<8x512xi32>
    %226 = arith.addi %221, %225 : vector<8x512xi32>
    %227 = vector.broadcast %214 : i32 to vector<8x512xi32>
    %228 = arith.muli %8, %227 : vector<8x512xi32>
    %c16_i32_81 = arith.constant 16 : i32
    %229 = vector.broadcast %c16_i32_81 : i32 to vector<8x512xi32>
    %230 = arith.shrsi %228, %229 : vector<8x512xi32>
    %c65535_i32_82 = arith.constant 65535 : i32
    %231 = vector.broadcast %c65535_i32_82 : i32 to vector<8x512xi32>
    %232 = arith.andi %228, %231 : vector<8x512xi32>
    %c15_i32_83 = arith.constant 15 : i32
    %233 = vector.broadcast %c15_i32_83 : i32 to vector<8x512xi32>
    %234 = arith.shli %232, %233 : vector<8x512xi32>
    %235 = arith.addi %230, %234 : vector<8x512xi32>
    %236 = vector.broadcast %215 : i32 to vector<8x512xi32>
    %237 = arith.muli %8, %236 : vector<8x512xi32>
    %c2147483647_i32_84 = arith.constant 2147483647 : i32
    %238 = vector.broadcast %c2147483647_i32_84 : i32 to vector<8x512xi32>
    %239 = arith.subi %238, %226 : vector<8x512xi32>
    %240 = arith.subi %217, %239 : vector<8x512xi32>
    %c0_i32_85 = arith.constant 0 : i32
    %241 = vector.broadcast %c0_i32_85 : i32 to vector<8x512xi32>
    %242 = arith.cmpi slt, %240, %241 : vector<8x512xi32>
    %c2147483647_i32_86 = arith.constant 2147483647 : i32
    %243 = vector.broadcast %c2147483647_i32_86 : i32 to vector<8x512xi32>
    %244 = arith.addi %240, %243 : vector<8x512xi32>
    %245 = arith.select %242, %244, %240 : vector<8x512xi1>, vector<8x512xi32>
    %c2147483647_i32_87 = arith.constant 2147483647 : i32
    %246 = vector.broadcast %c2147483647_i32_87 : i32 to vector<8x512xi32>
    %247 = arith.subi %246, %237 : vector<8x512xi32>
    %248 = arith.subi %235, %247 : vector<8x512xi32>
    %c0_i32_88 = arith.constant 0 : i32
    %249 = vector.broadcast %c0_i32_88 : i32 to vector<8x512xi32>
    %250 = arith.cmpi slt, %248, %249 : vector<8x512xi32>
    %c2147483647_i32_89 = arith.constant 2147483647 : i32
    %251 = vector.broadcast %c2147483647_i32_89 : i32 to vector<8x512xi32>
    %252 = arith.addi %248, %251 : vector<8x512xi32>
    %253 = arith.select %250, %252, %248 : vector<8x512xi1>, vector<8x512xi32>
    %c2147483647_i32_90 = arith.constant 2147483647 : i32
    %254 = vector.broadcast %c2147483647_i32_90 : i32 to vector<8x512xi32>
    %255 = arith.subi %254, %253 : vector<8x512xi32>
    %256 = arith.subi %245, %255 : vector<8x512xi32>
    %c0_i32_91 = arith.constant 0 : i32
    %257 = vector.broadcast %c0_i32_91 : i32 to vector<8x512xi32>
    %258 = arith.cmpi slt, %256, %257 : vector<8x512xi32>
    %c2147483647_i32_92 = arith.constant 2147483647 : i32
    %259 = vector.broadcast %c2147483647_i32_92 : i32 to vector<8x512xi32>
    %260 = arith.addi %256, %259 : vector<8x512xi32>
    %261 = arith.select %258, %260, %256 : vector<8x512xi1>, vector<8x512xi32>
    %c1000_i32_93 = arith.constant 1000 : i32
    %c0_i32_94 = arith.constant 0 : i32
    %262 = arith.cmpi eq, %c1000_i32_93, %c0_i32_94 : i32
    %c1_i32_95 = arith.constant 1 : i32
    %263 = arith.select %262, %c1_i32_95, %c1000_i32_93 : i32
    %264 = vector.broadcast %263 : i32 to vector<8x512xi32>
    %265 = arith.remsi %261, %264 : vector<8x512xi32>
    %c0_i32_96 = arith.constant 0 : i32
    %266 = vector.broadcast %c0_i32_96 : i32 to vector<8x512xi32>
    %267 = arith.cmpi ne, %265, %266 : vector<8x512xi32>
    %c0_i32_97 = arith.constant 0 : i32
    %268 = vector.broadcast %c0_i32_97 : i32 to vector<8x512xi32>
    %269 = arith.cmpi slt, %265, %268 : vector<8x512xi32>
    %c0_i32_98 = arith.constant 0 : i32
    %270 = arith.cmpi slt, %263, %c0_i32_98 : i32
    %271 = vector.broadcast %270 : i1 to vector<8x512xi1>
    %272 = vector.broadcast %271 : vector<8x512xi1> to vector<8x512xi1>
    %273 = arith.xori %269, %272 : vector<8x512xi1>
    %274 = arith.andi %273, %267 : vector<8x512xi1>
    %275 = vector.broadcast %263 : i32 to vector<8x512xi32>
    %276 = arith.addi %265, %275 : vector<8x512xi32>
    %277 = arith.select %274, %276, %265 : vector<8x512xi1>, vector<8x512xi32>
    %c3_99 = arith.constant 3 : index
    %c0_100 = arith.constant 0 : index
    %c0_101 = arith.constant 0 : index
    %278 = vector.load %arg3[%c3_99, %c0_100, %c0_101] : memref<4x8x512xi32, #tpu.memory_space<vmem>>, vector<1x8x512xi32>
    %279 = vector.shape_cast %278 : vector<1x8x512xi32> to vector<8x512xi32>
    %280 = vector.shape_cast %277 : vector<8x512xi32> to vector<1x8x512xi32>
    tpu.vector_store %arg3[%c3_99, %c0_100, %c0_101], %280 {strides = array<i32>} : memref<4x8x512xi32, #tpu.memory_space<vmem>>, vector<1x8x512xi32>,
    return
  }
  func.func @transform_0(%arg0: i32, %arg1: memref<4xi32, #tpu.memory_space<smem>>) -> (i32, i32) {
    %c0_i32 = arith.constant 0 : i32
    %c0_i32_0 = arith.constant 0 : i32
    return %arg0, %c0_i32 : i32, i32
  }
  func.func @transform_1(%arg0: i32, %arg1: memref<4xi32, #tpu.memory_space<smem>>) -> (i32, i32, i32) {
    %c0_i32 = arith.constant 0 : i32
    %c0_i32_0 = arith.constant 0 : i32
    %c0_i32_1 = arith.constant 0 : i32
    return %c0_i32, %arg0, %c0_i32_0 : i32, i32, i32
  }
}

</mosaic_0001>

<llo_original>
// kernel: tpu_custom_call.1
$region0: #{tpu_custom_call.1}
  #allocation0 [shape = 'u32[]', space=smem, size = 0x4, offset = 0x4, fixed_abs, tag = 'smem constant byte address 0x4 - core index']
  #allocation1 [shape = 'u32[72,128]{1,0:T(1,128)}', space=vmem, size = 0x9000, scoped, tag = 'internal scratch']
  #allocation2 [shape = 's32[1]{0}', space=sflag, size = 0x4, scoped, tag = 'scoped memory for tpu_custom_call.1']
  #allocation3 [shape = 'u8[512]{0}', space=smem, size = 0x200, scoped, tag = 'prefetched SMEM operand 0']
  %s0 = inlined_call_operand.hbm [shape: s32[4], index: 0, kind: input, shape index: {}]
  %s1 = inlined_call_operand.hbm [shape: s32[16,512], index: 1, kind: input, shape index: {}]
  %s2 = inlined_call_operand.hbm [shape: s32[4,16,512], index: 2, kind: output, shape index: {}]
  %s3 = sld [smem:[#allocation0]]
  $region41: #{tpu_custom_call.1} parent=0
    _
  %s5 = ssub.s32 1, %s3
  %s6 = scalar_select 0, %s5, %s3
  %s8 = sshll.u32 %s0, 4
  %s9 = int_to_ptr.hbm [resolvable:$true] %s8
  %11 = dma.hbm_to_smem %s9, 16, [#allocation3], [#allocation2]
  %13 = dma.done [#allocation2], 16
  %14 = sfence
  $region1: #{tpu_custom_call.1} parent=0
    #allocation4 [shape = 'u8[32768]{0}', space=vmem, size = 0x8000, scoped, tag = 'input window, operand 1']
    #allocation5 [shape = 's32[2]{0}', space=sflag, size = 0x8, scoped, tag = 'scoped memory for tpu_custom_call.1']
    #allocation6 [shape = 's32[2]{0}', space=sflag, size = 0x8, scoped, tag = 'scoped memory for tpu_custom_call.1']
    #allocation7 [shape = 'u8[131072]{0}', space=vmem, size = 0x20000, scoped, tag = 'output window, operand 0']
    %15 = vsyncpa [#allocation5], 0
    %s16 = scalar_lea.sflag [#allocation5], 1
    %17 = vsyncpa %s16, 0
    %18 = vsyncpa [#allocation6], 0
    %s19 = scalar_lea.sflag [#allocation6], 1
    %20 = vsyncpa %s19, 0
    loop: start=0, step=1, limit=4
    $region2: #{tpu_custom_call.1} parent=1 // loop_pre_header
      _
    $region3: #{tpu_custom_call.1} parent=1 // loop_header
      %s22 = sphi 0, %s26
      %p23 = scmp.ge.s32.totalorder %s22, 4
      %s32 = sphi 0, %s34
      %s35 = sphi 0, %s32
      %s36 = sphi 0, %s35
      %s52 = sphi 0, %s36
      %s58 = sphi 0, %s60
      %s61 = sphi 0, %s58
      %s62 = sphi 0, %s61
      %s78 = sphi 0, %s62
    $region4: #{tpu_custom_call.1} parent=1 // loop_header_branch
      %25 = sbr.rel (%p23) target = $region8
    $region5: #{tpu_custom_call.1} parent=1 // loop_body
      %s27 = ssub.s32 %s22, 1
      %s28 = ssub.s32 %s22, 2
      %s29 = sadd.s32 %s22, 1
      %s30 = ssub.s32 %s22, %s29
      %p31 = scmp.eq.s32.totalorder %s30, 0
      %s33 = sadd.s32 %s32, 1
      %s34 = scalar_select %p31, %s32, %s33
      %p37 = pneg %p31
      %p38 = scmp.eq.s32.totalorder %s22, 1
      %p39 = por %p37, %p38
      %p40 = scmp.ne.s32.totalorder %s32, %s35
      %p41 = scmp.eq.s32.totalorder %s22, 0
      %p42 = por %p40, %p41
      %p43 = scmp.ne.s32.totalorder %s32, %s35
      %p44 = scmp.eq.s32.totalorder %s27, 1
      %p45 = por %p43, %p44
      %p46 = scmp.ne.s32.totalorder %s35, %s36
      %p47 = scmp.eq.s32.totalorder %s27, 0
      %p48 = por %p46, %p47
      %p49 = scmp.ne.s32.totalorder %s35, %s36
      %p50 = scmp.eq.s32.totalorder %s28, 1
      %p51 = por %p49, %p50
      %p53 = scmp.ne.s32.totalorder %s36, %s52
      %p54 = scmp.eq.s32.totalorder %s28, 0
      %p55 = por %p53, %p54
      %s56 = ssub.s32 %s22, %s29
      %p57 = scmp.eq.s32.totalorder %s56, 0
      %s59 = sadd.s32 %s58, 1
      %s60 = scalar_select %p57, %s58, %s59
      %p63 = pneg %p57
      %p64 = scmp.eq.s32.totalorder %s22, 1
      %p65 = por %p63, %p64
      %p66 = scmp.ne.s32.totalorder %s58, %s61
      %p67 = scmp.eq.s32.totalorder %s22, 0
      %p68 = por %p66, %p67
      %p69 = scmp.ne.s32.totalorder %s58, %s61
      %p70 = scmp.eq.s32.totalorder %s27, 1
      %p71 = por %p69, %p70
      %p72 = scmp.ne.s32.totalorder %s61, %s62
      %p73 = scmp.eq.s32.totalorder %s27, 0
      %p74 = por %p72, %p73
      %p75 = scmp.ne.s32.totalorder %s61, %s62
      %p76 = scmp.eq.s32.totalorder %s28, 1
      %p77 = por %p75, %p76
      %p79 = scmp.ne.s32.totalorder %s62, %s78
      %p80 = scmp.eq.s32.totalorder %s28, 0
      %p81 = por %p79, %p80
      %p82 = scmp.le.s32.totalorder 1, %s22
      %p83 = scmp.lt.s32.totalorder %s22, 3
      %p84 = pnand %p82, %p83
      %p85 = pneg %p84
      // Predicated region
      $region9: #{tpu_custom_call.1} parent=5 // pred_check
        _
      $region10: #{tpu_custom_call.1} parent=5 // pred_check_branch
        %87 = sbr.rel (%p84) target = $region12
      $region11: #{tpu_custom_call.1} parent=5 // pred_region
        %s88 = ssub.s32 %s22, 1
      $region12: #{tpu_custom_call.1} parent=5 // pred_fallthru
        _
      %p89 = scmp.lt.s32.totalorder %s22, 2
      // Predicated region
      $region13: #{tpu_custom_call.1} parent=5 // pred_check
        %p90 = pneg %p89
      $region14: #{tpu_custom_call.1} parent=5 // pred_check_branch
        %92 = sbr.rel (%p90) target = $region16
      $region15: #{tpu_custom_call.1} parent=5 // pred_region
        // Predicated region
        $region17: #{tpu_custom_call.1} parent=15 // pred_check
          %p93 = pneg %p42
        $region18: #{tpu_custom_call.1} parent=15 // pred_check_branch
          %95 = sbr.rel (%p93) target = $region20
        $region19: #{tpu_custom_call.1} parent=15 // pred_region
          %s96 = sand.u32 %s32, 1
          %s97 = scalar_lea.sflag [#allocation5], %s96
          %s98 = sand.u32 %s32, 1
          %s99 = smul.addr %s98, 32
          %s100 = scalar_lea.vmem [#allocation4], %s99
          %102 = vsyncadd %s97, 0
          %s103 = smul.addr %s22, 4
          %s104 = smul.addr %s103, 8
          %s105 = scalar_lea.hbm %s1, %s104
          %s107 = sshll.u32 %s105, 4
          %s108 = int_to_ptr.hbm [resolvable:$true] %s107
          %s109 = sshll.u32 %s100, 4
          %s110 = int_to_ptr.vmem [resolvable:$true] %s109
          %112 = dma.hbm_to_vmem [thread:$0]  %s108, 512, %s110, %s97
        $region20: #{tpu_custom_call.1} parent=15 // pred_fallthru
          _
      $region16: #{tpu_custom_call.1} parent=5 // pred_fallthru
        _
      %p113 = scmp.le.s32.totalorder 1, %s22
      %p114 = scmp.lt.s32.totalorder %s22, 3
      %p115 = pnand %p113, %p114
      %p116 = pneg %p115
      // Predicated region
      $region21: #{tpu_custom_call.1} parent=5 // pred_check
        _
      $region22: #{tpu_custom_call.1} parent=5 // pred_check_branch
        %118 = sbr.rel (%p115) target = $region24
      $region23: #{tpu_custom_call.1} parent=5 // pred_region
        %s119 = ssub.s32 %s22, 1
        %s120 = sand.u32 %s35, 1
        %s121 = scalar_lea.sflag [#allocation5], %s120
        %s122 = sand.u32 %s35, 1
        %s123 = smul.addr %s122, 32
        %s124 = scalar_lea.vmem [#allocation4], %s123
        // Predicated region
        $region25: #{tpu_custom_call.1} parent=23 // pred_check
          %p125 = pneg %p48
        $region26: #{tpu_custom_call.1} parent=23 // pred_check_branch
          %127 = sbr.rel (%p125) target = $region28
        $region27: #{tpu_custom_call.1} parent=23 // pred_region
          %129 = dma.done %s121, 512
        $region28: #{tpu_custom_call.1} parent=23 // pred_fallthru
          _
        %s130 = sand.u32 %s35, 1
        %s131 = scalar_lea.sflag [#allocation5], %s130
        %s132 = sand.u32 %s35, 1
        %s133 = smul.addr %s132, 32
        %s134 = scalar_lea.vmem [#allocation4], %s133
        %p135 = pneg %p48
        %p136 = pneg %p45
        %p137 = pneg %p74
        %p138 = pneg %p71
        %s139 = sand.u32 %s61, 1
        %s140 = scalar_lea.sflag [#allocation6], %s139
        %s141 = sand.u32 %s61, 1
        %s142 = smul.addr %s141, 128
        %s143 = scalar_lea.vmem [#allocation7], %s142
        %v144 = vld [vmem:[%s124] sm:$0xff]
        %v145 = vld [vmem:[%s124 + $0x8] sm:$0xff]
        %v146 = vld [vmem:[%s124 + $0x10] sm:$0xff]
        %v147 = vld [vmem:[%s124 + $0x18] sm:$0xff]
        %vm148 = vcmp.eq.s32.totalorder %v144, 2147483647
        %vm149 = vcmp.eq.s32.totalorder %v145, 2147483647
        %vm150 = vcmp.eq.s32.totalorder %v146, 2147483647
        %vm151 = vcmp.eq.s32.totalorder %v147, 2147483647
        %v152 = vsel %vm148, 0, %v144
        %v153 = vsel %vm149, 0, %v145
        %v154 = vsel %vm150, 0, %v146
        %v155 = vsel %vm151, 0, %v147
        %v156 = vshra.s32 %v152, 16
        %v157 = vshra.s32 %v153, 16
        %v158 = vshra.s32 %v154, 16
        %v159 = vshra.s32 %v155, 16
        %v160 = vand.u32 %v152, 65535
        %v161 = vand.u32 %v153, 65535
        %v162 = vand.u32 %v154, 65535
        %v163 = vand.u32 %v155, 65535
        %s164 = sld [smem:[#allocation3]]
        %s165 = sshra.s32 %s164, 15
        %s166 = sand.u32 %s164, 32767
        %v167 = vstv %s165
        %v168 = vmul.u32 %v156, %v167
        %v169 = vmul.u32 %v157, %v167
        %v170 = vmul.u32 %v158, %v167
        %v171 = vmul.u32 %v159, %v167
        %v172 = vstv %s166
        %v173 = vmul.u32 %v156, %v172
        %v174 = vmul.u32 %v157, %v172
        %v175 = vmul.u32 %v158, %v172
        %v176 = vmul.u32 %v159, %v172
        %v177 = vshra.s32 %v173, 15
        %v178 = vshra.s32 %v174, 15
        %v179 = vshra.s32 %v175, 15
        %v180 = vshra.s32 %v176, 15
        %v181 = vand.u32 %v173, 32767
        %v182 = vand.u32 %v174, 32767
        %v183 = vand.u32 %v175, 32767
        %v184 = vand.u32 %v176, 32767
        %v185 = vshll.u32 %v181, 16
        %v186 = vshll.u32 %v182, 16
        %v187 = vshll.u32 %v183, 16
        %v188 = vshll.u32 %v184, 16
        %v189 = vadd.s32 %v177, %v185
        %v190 = vadd.s32 %v178, %v186
        %v191 = vadd.s32 %v179, %v187
        %v192 = vadd.s32 %v180, %v188
        %v193 = vmul.u32 %v160, %v167
        %v194 = vmul.u32 %v161, %v167
        %v195 = vmul.u32 %v162, %v167
        %v196 = vmul.u32 %v163, %v167
        %v197 = vshra.s32 %v193, 16
        %v198 = vshra.s32 %v194, 16
        %v199 = vshra.s32 %v195, 16
        %v200 = vshra.s32 %v196, 16
        %v201 = vand.u32 %v193, 65535
        %v202 = vand.u32 %v194, 65535
        %v203 = vand.u32 %v195, 65535
        %v204 = vand.u32 %v196, 65535
        %v205 = vshll.u32 %v201, 15
        %v206 = vshll.u32 %v202, 15
        %v207 = vshll.u32 %v203, 15
        %v208 = vshll.u32 %v204, 15
        %v209 = vadd.s32 %v197, %v205
        %v210 = vadd.s32 %v198, %v206
        %v211 = vadd.s32 %v199, %v207
        %v212 = vadd.s32 %v200, %v208
        %v213 = vmul.u32 %v160, %v172
        %v214 = vmul.u32 %v161, %v172
        %v215 = vmul.u32 %v162, %v172
        %v216 = vmul.u32 %v163, %v172
        %v217 = vsub.s32 2147483647, %v189
        %v218 = vsub.s32 2147483647, %v190
        %v219 = vsub.s32 2147483647, %v191
        %v220 = vsub.s32 2147483647, %v192
        %v221 = vsub.s32 %v168, %v217
        %v222 = vsub.s32 %v169, %v218
        %v223 = vsub.s32 %v170, %v219
        %v224 = vsub.s32 %v171, %v220
        %vm225 = vcmp.lt.s32.totalorder %v221, 0
        %vm226 = vcmp.lt.s32.totalorder %v222, 0
        %vm227 = vcmp.lt.s32.totalorder %v223, 0
        %vm228 = vcmp.lt.s32.totalorder %v224, 0
        %v229 = vadd.s32 %v221, 2147483647
        %v230 = vadd.s32 %v222, 2147483647
        %v231 = vadd.s32 %v223, 2147483647
        %v232 = vadd.s32 %v224, 2147483647
        %v233 = vsel %vm225, %v229, %v221
        %v234 = vsel %vm226, %v230, %v222
        %v235 = vsel %vm227, %v231, %v223
        %v236 = vsel %vm228, %v232, %v224
        %v237 = vsub.s32 2147483647, %v213
        %v238 = vsub.s32 2147483647, %v214
        %v239 = vsub.s32 2147483647, %v215
        %v240 = vsub.s32 2147483647, %v216
        %v241 = vsub.s32 %v209, %v237
        %v242 = vsub.s32 %v210, %v238
        %v243 = vsub.s32 %v211, %v239
        %v244 = vsub.s32 %v212, %v240
        %vm245 = vcmp.lt.s32.totalorder %v241, 0
        %vm246 = vcmp.lt.s32.totalorder %v242, 0
        %vm247 = vcmp.lt.s32.totalorder %v243, 0
        %vm248 = vcmp.lt.s32.totalorder %v244, 0
        %v249 = vadd.s32 %v241, 2147483647
        %v250 = vadd.s32 %v242, 2147483647
        %v251 = vadd.s32 %v243, 2147483647
        %v252 = vadd.s32 %v244, 2147483647
        %v253 = vsel %vm245, %v249, %v241
        %v254 = vsel %vm246, %v250, %v242
        %v255 = vsel %vm247, %v251, %v243
        %v256 = vsel %vm248, %v252, %v244
        %v257 = vsub.s32 2147483647, %v253
        %v258 = vsub.s32 2147483647, %v254
        %v259 = vsub.s32 2147483647, %v255
        %v260 = vsub.s32 2147483647, %v256
        %v261 = vsub.s32 %v233, %v257
        %v262 = vsub.s32 %v234, %v258
        %v263 = vsub.s32 %v235, %v259
        %v264 = vsub.s32 %v236, %v260
        %vm265 = vcmp.lt.s32.totalorder %v261, 0
        %vm266 = vcmp.lt.s32.totalorder %v262, 0
        %vm267 = vcmp.lt.s32.totalorder %v263, 0
        %vm268 = vcmp.lt.s32.totalorder %v264, 0
        %v269 = vadd.s32 %v261, 2147483647
        %v270 = vadd.s32 %v262, 2147483647
        %v271 = vadd.s32 %v263, 2147483647
        %v272 = vadd.s32 %v264, 2147483647
        %v273 = vsel %vm265, %v269, %v261
        %v274 = vsel %vm266, %v270, %v262
        %v275 = vsel %vm267, %v271, %v263
        %v276 = vsel %vm268, %v272, %v264
        %vm277 = vcmp.lt.s32.totalorder %v273, 0
        %v278 = vsub.s32 0, %v273
        %v279 = vsel %vm277, %v278, %v273
        %v280 = vand.u32 %v279, 65535
        %v281 = vshrl.u32 %v279, 16
        %v283 = vmul.u32 %v280, 28312
        %v284 = vmul.u32 %v280, 33554
        %v285 = vmul.u32 %v281, 28312
        %v286 = vmul.u32 %v281, 33554
        %v287 = vshll.u32 %v284, 16
        %v288 = vshrl.u32 %v284, 16
        %v289 = vshll.u32 %v285, 16
        %v290 = vshrl.u32 %v285, 16
        %vm291 = vc.u32 %v283, %v287
        %v292 = vsel %vm291, 1, 0
        %v293 = vadd.s32 %v283, %v287
        %v294 = vadd.s32 %v286, %v292
        %vm295 = vc.u32 %v293, %v289
        %v296 = vsel %vm295, 1, 0
        %v297 = vadd.s32 %v293, %v289
        %v298 = vadd.s32 %v294, %v296
        %v299 = vadd.s32 %v298, %v288
        %v300 = vadd.s32 %v299, %v290
        %v301 = vshrl.u32 %v300, 9
        %v302 = vmul.u32 %v301, 1000
        %v303 = vsub.s32 %v279, %v302
        %v304 = vsub.s32 0, %v303
        %v305 = vsel %vm277, %v304, %v303
        %vm306 = vcmp.lt.s32.totalorder %v274, 0
        %v307 = vsub.s32 0, %v274
        %v308 = vsel %vm306, %v307, %v274
        %v309 = vand.u32 %v308, 65535
        %v310 = vshrl.u32 %v308, 16
        %v312 = vmul.u32 %v309, 28312
        %v313 = vmul.u32 %v309, 33554
        %v314 = vmul.u32 %v310, 28312
        %v315 = vmul.u32 %v310, 33554
        %v316 = vshll.u32 %v313, 16
        %v317 = vshrl.u32 %v313, 16
        %v318 = vshll.u32 %v314, 16
        %v319 = vshrl.u32 %v314, 16
        %vm320 = vc.u32 %v312, %v316
        %v321 = vsel %vm320, 1, 0
        %v322 = vadd.s32 %v312, %v316
        %v323 = vadd.s32 %v315, %v321
        %vm324 = vc.u32 %v322, %v318
        %v325 = vsel %vm324, 1, 0
        %v326 = vadd.s32 %v322, %v318
        %v327 = vadd.s32 %v323, %v325
        %v328 = vadd.s32 %v327, %v317
        %v329 = vadd.s32 %v328, %v319
        %v330 = vshrl.u32 %v329, 9
        %v331 = vmul.u32 %v330, 1000
        %v332 = vsub.s32 %v308, %v331
        %v333 = vsub.s32 0, %v332
        %v334 = vsel %vm306, %v333, %v332
        %vm335 = vcmp.lt.s32.totalorder %v275, 0
        %v336 = vsub.s32 0, %v275
        %v337 = vsel %vm335, %v336, %v275
        %v338 = vand.u32 %v337, 65535
        %v339 = vshrl.u32 %v337, 16
        %v341 = vmul.u32 %v338, 28312
        %v342 = vmul.u32 %v338, 33554
        %v343 = vmul.u32 %v339, 28312
        %v344 = vmul.u32 %v339, 33554
        %v345 = vshll.u32 %v342, 16
        %v346 = vshrl.u32 %v342, 16
        %v347 = vshll.u32 %v343, 16
        %v348 = vshrl.u32 %v343, 16
        %vm349 = vc.u32 %v341, %v345
        %v350 = vsel %vm349, 1, 0
        %v351 = vadd.s32 %v341, %v345
        %v352 = vadd.s32 %v344, %v350
        %vm353 = vc.u32 %v351, %v347
        %v354 = vsel %vm353, 1, 0
        %v355 = vadd.s32 %v351, %v347
        %v356 = vadd.s32 %v352, %v354
        %v357 = vadd.s32 %v356, %v346
        %v358 = vadd.s32 %v357, %v348
        %v359 = vshrl.u32 %v358, 9
        %v360 = vmul.u32 %v359, 1000
        %v361 = vsub.s32 %v337, %v360
        %v362 = vsub.s32 0, %v361
        %v363 = vsel %vm335, %v362, %v361
        %vm364 = vcmp.lt.s32.totalorder %v276, 0
        %v365 = vsub.s32 0, %v276
        %v366 = vsel %vm364, %v365, %v276
        %v367 = vand.u32 %v366, 65535
        %v368 = vshrl.u32 %v366, 16
        %v370 = vmul.u32 %v367, 28312
        %v371 = vmul.u32 %v367, 33554
        %v372 = vmul.u32 %v368, 28312
        %v373 = vmul.u32 %v368, 33554
        %v374 = vshll.u32 %v371, 16
        %v375 = vshrl.u32 %v371, 16
        %v376 = vshll.u32 %v372, 16
        %v377 = vshrl.u32 %v372, 16
        %vm378 = vc.u32 %v370, %v374
        %v379 = vsel %vm378, 1, 0
        %v380 = vadd.s32 %v370, %v374
        %v381 = vadd.s32 %v373, %v379
        %vm382 = vc.u32 %v380, %v376
        %v383 = vsel %vm382, 1, 0
        %v384 = vadd.s32 %v380, %v376
        %v385 = vadd.s32 %v381, %v383
        %v386 = vadd.s32 %v385, %v375
        %v387 = vadd.s32 %v386, %v377
        %v388 = vshrl.u32 %v387, 9
        %v389 = vmul.u32 %v388, 1000
        %v390 = vsub.s32 %v366, %v389
        %v391 = vsub.s32 0, %v390
        %v392 = vsel %vm364, %v391, %v390
        %vm393 = vcmp.ne.s32.totalorder %v305, 0
        %vm394 = vcmp.ne.s32.totalorder %v334, 0
        %vm395 = vcmp.ne.s32.totalorder %v363, 0
        %vm396 = vcmp.ne.s32.totalorder %v392, 0
        %vm397 = vcmp.lt.s32.totalorder %v305, 0
        %vm398 = vcmp.lt.s32.totalorder %v334, 0
        %vm399 = vcmp.lt.s32.totalorder %v363, 0
        %vm400 = vcmp.lt.s32.totalorder %v392, 0
        %vm401 = vmand %vm397, %vm393
        %vm402 = vmand %vm398, %vm394
        %vm403 = vmand %vm399, %vm395
        %vm404 = vmand %vm400, %vm396
        %v405 = vadd.s32 %v305, 1000
        %v406 = vadd.s32 %v334, 1000
        %v407 = vadd.s32 %v363, 1000
        %v408 = vadd.s32 %v392, 1000
        %v409 = vsel %vm401, %v405, %v305
        %v410 = vsel %vm402, %v406, %v334
        %v411 = vsel %vm403, %v407, %v363
        %v412 = vsel %vm404, %v408, %v392
        %413 = vst [vmem:[%s143] sm:$0xff] %v409
        %414 = vst [vmem:[%s143 + $0x8] sm:$0xff] %v410
        %415 = vst [vmem:[%s143 + $0x10] sm:$0xff] %v411
        %416 = vst [vmem:[%s143 + $0x18] sm:$0xff] %v412
        %s417 = sld [smem:[#allocation3 + $0x1]]
        %s418 = sshra.s32 %s417, 15
        %s419 = sand.u32 %s417, 32767
        %v420 = vstv %s418
        %v421 = vmul.u32 %v156, %v420
        %v422 = vmul.u32 %v157, %v420
        %v423 = vmul.u32 %v158, %v420
        %v424 = vmul.u32 %v159, %v420
        %v425 = vstv %s419
        %v426 = vmul.u32 %v156, %v425
        %v427 = vmul.u32 %v157, %v425
        %v428 = vmul.u32 %v158, %v425
        %v429 = vmul.u32 %v159, %v425
        %v430 = vshra.s32 %v426, 15
        %v431 = vshra.s32 %v427, 15
        %v432 = vshra.s32 %v428, 15
        %v433 = vshra.s32 %v429, 15
        %v434 = vand.u32 %v426, 32767
        %v435 = vand.u32 %v427, 32767
        %v436 = vand.u32 %v428, 32767
        %v437 = vand.u32 %v429, 32767
        %v438 = vshll.u32 %v434, 16
        %v439 = vshll.u32 %v435, 16
        %v440 = vshll.u32 %v436, 16
        %v441 = vshll.u32 %v437, 16
        %v442 = vadd.s32 %v430, %v438
        %v443 = vadd.s32 %v431, %v439
        %v444 = vadd.s32 %v432, %v440
        %v445 = vadd.s32 %v433, %v441
        %v446 = vmul.u32 %v160, %v420
        %v447 = vmul.u32 %v161, %v420
        %v448 = vmul.u32 %v162, %v420
        %v449 = vmul.u32 %v163, %v420
        %v450 = vshra.s32 %v446, 16
        %v451 = vshra.s32 %v447, 16
        %v452 = vshra.s32 %v448, 16
        %v453 = vshra.s32 %v449, 16
        %v454 = vand.u32 %v446, 65535
        %v455 = vand.u32 %v447, 65535
        %v456 = vand.u32 %v448, 65535
        %v457 = vand.u32 %v449, 65535
        %v458 = vshll.u32 %v454, 15
        %v459 = vshll.u32 %v455, 15
        %v460 = vshll.u32 %v456, 15
        %v461 = vshll.u32 %v457, 15
        %v462 = vadd.s32 %v450, %v458
        %v463 = vadd.s32 %v451, %v459
        %v464 = vadd.s32 %v452, %v460
        %v465 = vadd.s32 %v453, %v461
        %v466 = vmul.u32 %v160, %v425
        %v467 = vmul.u32 %v161, %v425
        %v468 = vmul.u32 %v162, %v425
        %v469 = vmul.u32 %v163, %v425
        %v470 = vsub.s32 2147483647, %v442
        %v471 = vsub.s32 2147483647, %v443
        %v472 = vsub.s32 2147483647, %v444
        %v473 = vsub.s32 2147483647, %v445
        %v474 = vsub.s32 %v421, %v470
        %v475 = vsub.s32 %v422, %v471
        %v476 = vsub.s32 %v423, %v472
        %v477 = vsub.s32 %v424, %v473
        %vm478 = vcmp.lt.s32.totalorder %v474, 0
        %vm479 = vcmp.lt.s32.totalorder %v475, 0
        %vm480 = vcmp.lt.s32.totalorder %v476, 0
        %vm481 = vcmp.lt.s32.totalorder %v477, 0
        %v482 = vadd.s32 %v474, 2147483647
        %v483 = vadd.s32 %v475, 2147483647
        %v484 = vadd.s32 %v476, 2147483647
        %v485 = vadd.s32 %v477, 2147483647
        %v486 = vsel %vm478, %v482, %v474
        %v487 = vsel %vm479, %v483, %v475
        %v488 = vsel %vm480, %v484, %v476
        %v489 = vsel %vm481, %v485, %v477
        %v490 = vsub.s32 2147483647, %v466
        %v491 = vsub.s32 2147483647, %v467
        %v492 = vsub.s32 2147483647, %v468
        %v493 = vsub.s32 2147483647, %v469
        %v494 = vsub.s32 %v462, %v490
        %v495 = vsub.s32 %v463, %v491
        %v496 = vsub.s32 %v464, %v492
        %v497 = vsub.s32 %v465, %v493
        %vm498 = vcmp.lt.s32.totalorder %v494, 0
        %vm499 = vcmp.lt.s32.totalorder %v495, 0
        %vm500 = vcmp.lt.s32.totalorder %v496, 0
        %vm501 = vcmp.lt.s32.totalorder %v497, 0
        %v502 = vadd.s32 %v494, 2147483647
        %v503 = vadd.s32 %v495, 2147483647
        %v504 = vadd.s32 %v496, 2147483647
        %v505 = vadd.s32 %v497, 2147483647
        %v506 = vsel %vm498, %v502, %v494
        %v507 = vsel %vm499, %v503, %v495
        %v508 = vsel %vm500, %v504, %v496
        %v509 = vsel %vm501, %v505, %v497
        %v510 = vsub.s32 2147483647, %v506
        %v511 = vsub.s32 2147483647, %v507
        %v512 = vsub.s32 2147483647, %v508
        %v513 = vsub.s32 2147483647, %v509
        %v514 = vsub.s32 %v486, %v510
        %v515 = vsub.s32 %v487, %v511
        %v516 = vsub.s32 %v488, %v512
        %v517 = vsub.s32 %v489, %v513
        %vm518 = vcmp.lt.s32.totalorder %v514, 0
        %vm519 = vcmp.lt.s32.totalorder %v515, 0
        %vm520 = vcmp.lt.s32.totalorder %v516, 0
        %vm521 = vcmp.lt.s32.totalorder %v517, 0
        %v522 = vadd.s32 %v514, 2147483647
        %v523 = vadd.s32 %v515, 2147483647
        %v524 = vadd.s32 %v516, 2147483647
        %v525 = vadd.s32 %v517, 2147483647
        %v526 = vsel %vm518, %v522, %v514
        %v527 = vsel %vm519, %v523, %v515
        %v528 = vsel %vm520, %v524, %v516
        %v529 = vsel %vm521, %v525, %v517
        %vm530 = vcmp.lt.s32.totalorder %v526, 0
        %v531 = vsub.s32 0, %v526
        %v532 = vsel %vm530, %v531, %v526
        %v533 = vand.u32 %v532, 65535
        %v534 = vshrl.u32 %v532, 16
        %v536 = vmul.u32 %v533, 28312
        %v537 = vmul.u32 %v533, 33554
        %v538 = vmul.u32 %v534, 28312
        %v539 = vmul.u32 %v534, 33554
        %v540 = vshll.u32 %v537, 16
        %v541 = vshrl.u32 %v537, 16
        %v542 = vshll.u32 %v538, 16
        %v543 = vshrl.u32 %v538, 16
        %vm544 = vc.u32 %v536, %v540
        %v545 = vsel %vm544, 1, 0
        %v546 = vadd.s32 %v536, %v540
        %v547 = vadd.s32 %v539, %v545
        %vm548 = vc.u32 %v546, %v542
        %v549 = vsel %vm548, 1, 0
        %v550 = vadd.s32 %v546, %v542
        %v551 = vadd.s32 %v547, %v549
        %v552 = vadd.s32 %v551, %v541
        %v553 = vadd.s32 %v552, %v543
        %v554 = vshrl.u32 %v553, 9
        %v555 = vmul.u32 %v554, 1000
        %v556 = vsub.s32 %v532, %v555
        %v557 = vsub.s32 0, %v556
        %v558 = vsel %vm530, %v557, %v556
        %vm559 = vcmp.lt.s32.totalorder %v527, 0
        %v560 = vsub.s32 0, %v527
        %v561 = vsel %vm559, %v560, %v527
        %v562 = vand.u32 %v561, 65535
        %v563 = vshrl.u32 %v561, 16
        %v565 = vmul.u32 %v562, 28312
        %v566 = vmul.u32 %v562, 33554
        %v567 = vmul.u32 %v563, 28312
        %v568 = vmul.u32 %v563, 33554
        %v569 = vshll.u32 %v566, 16
        %v570 = vshrl.u32 %v566, 16
        %v571 = vshll.u32 %v567, 16
        %v572 = vshrl.u32 %v567, 16
        %vm573 = vc.u32 %v565, %v569
        %v574 = vsel %vm573, 1, 0
        %v575 = vadd.s32 %v565, %v569
        %v576 = vadd.s32 %v568, %v574
        %vm577 = vc.u32 %v575, %v571
        %v578 = vsel %vm577, 1, 0
        %v579 = vadd.s32 %v575, %v571
        %v580 = vadd.s32 %v576, %v578
        %v581 = vadd.s32 %v580, %v570
        %v582 = vadd.s32 %v581, %v572
        %v583 = vshrl.u32 %v582, 9
        %v584 = vmul.u32 %v583, 1000
        %v585 = vsub.s32 %v561, %v584
        %v586 = vsub.s32 0, %v585
        %v587 = vsel %vm559, %v586, %v585
        %vm588 = vcmp.lt.s32.totalorder %v528, 0
        %v589 = vsub.s32 0, %v528
        %v590 = vsel %vm588, %v589, %v528
        %v591 = vand.u32 %v590, 65535
        %v592 = vshrl.u32 %v590, 16
        %v594 = vmul.u32 %v591, 28312
        %v595 = vmul.u32 %v591, 33554
        %v596 = vmul.u32 %v592, 28312
        %v597 = vmul.u32 %v592, 33554
        %v598 = vshll.u32 %v595, 16
        %v599 = vshrl.u32 %v595, 16
        %v600 = vshll.u32 %v596, 16
        %v601 = vshrl.u32 %v596, 16
        %vm602 = vc.u32 %v594, %v598
        %v603 = vsel %vm602, 1, 0
        %v604 = vadd.s32 %v594, %v598
        %v605 = vadd.s32 %v597, %v603
        %vm606 = vc.u32 %v604, %v600
        %v607 = vsel %vm606, 1, 0
        %v608 = vadd.s32 %v604, %v600
        %v609 = vadd.s32 %v605, %v607
        %v610 = vadd.s32 %v609, %v599
        %v611 = vadd.s32 %v610, %v601
        %v612 = vshrl.u32 %v611, 9
        %v613 = vmul.u32 %v612, 1000
        %v614 = vsub.s32 %v590, %v613
        %v615 = vsub.s32 0, %v614
        %v616 = vsel %vm588, %v615, %v614
        %vm617 = vcmp.lt.s32.totalorder %v529, 0
        %v618 = vsub.s32 0, %v529
        %v619 = vsel %vm617, %v618, %v529
        %v620 = vand.u32 %v619, 65535
        %v621 = vshrl.u32 %v619, 16
        %v623 = vmul.u32 %v620, 28312
        %v624 = vmul.u32 %v620, 33554
        %v625 = vmul.u32 %v621, 28312
        %v626 = vmul.u32 %v621, 33554
        %v627 = vshll.u32 %v624, 16
        %v628 = vshrl.u32 %v624, 16
        %v629 = vshll.u32 %v625, 16
        %v630 = vshrl.u32 %v625, 16
        %vm631 = vc.u32 %v623, %v627
        %v632 = vsel %vm631, 1, 0
        %v633 = vadd.s32 %v623, %v627
        %v634 = vadd.s32 %v626, %v632
        %vm635 = vc.u32 %v633, %v629
        %v636 = vsel %vm635, 1, 0
        %v637 = vadd.s32 %v633, %v629
        %v638 = vadd.s32 %v634, %v636
        %v639 = vadd.s32 %v638, %v628
        %v640 = vadd.s32 %v639, %v630
        %v641 = vshrl.u32 %v640, 9
        %v642 = vmul.u32 %v641, 1000
        %v643 = vsub.s32 %v619, %v642
        %v644 = vsub.s32 0, %v643
        %v645 = vsel %vm617, %v644, %v643
        %vm646 = vcmp.ne.s32.totalorder %v558, 0
        %vm647 = vcmp.ne.s32.totalorder %v587, 0
        %vm648 = vcmp.ne.s32.totalorder %v616, 0
        %vm649 = vcmp.ne.s32.totalorder %v645, 0
        %vm650 = vcmp.lt.s32.totalorder %v558, 0
        %vm651 = vcmp.lt.s32.totalorder %v587, 0
        %vm652 = vcmp.lt.s32.totalorder %v616, 0
        %vm653 = vcmp.lt.s32.totalorder %v645, 0
        %vm654 = vmand %vm650, %vm646
        %vm655 = vmand %vm651, %vm647
        %vm656 = vmand %vm652, %vm648
        %vm657 = vmand %vm653, %vm649
        %v658 = vadd.s32 %v558, 1000
        %v659 = vadd.s32 %v587, 1000
        %v660 = vadd.s32 %v616, 1000
        %v661 = vadd.s32 %v645, 1000
        %v662 = vsel %vm654, %v658, %v558
        %v663 = vsel %vm655, %v659, %v587
        %v664 = vsel %vm656, %v660, %v616
        %v665 = vsel %vm657, %v661, %v645
        %s666 = scalar_lea.vmem %s143, 32 [#allocation7]
        %667 = vst [vmem:[%s666] sm:$0xff] %v662
        %668 = vst [vmem:[%s666 + $0x8] sm:$0xff] %v663
        %669 = vst [vmem:[%s666 + $0x10] sm:$0xff] %v664
        %670 = vst [vmem:[%s666 + $0x18] sm:$0xff] %v665
        %s671 = sld [smem:[#allocation3 + $0x2]]
        %s672 = sshra.s32 %s671, 15
        %s673 = sand.u32 %s671, 32767
        %v674 = vstv %s672
        %v675 = vmul.u32 %v156, %v674
        %v676 = vmul.u32 %v157, %v674
        %v677 = vmul.u32 %v158, %v674
        %v678 = vmul.u32 %v159, %v674
        %v679 = vstv %s673
        %v680 = vmul.u32 %v156, %v679
        %v681 = vmul.u32 %v157, %v679
        %v682 = vmul.u32 %v158, %v679
        %v683 = vmul.u32 %v159, %v679
        %v684 = vshra.s32 %v680, 15
        %v685 = vshra.s32 %v681, 15
        %v686 = vshra.s32 %v682, 15
        %v687 = vshra.s32 %v683, 15
        %v688 = vand.u32 %v680, 32767
        %v689 = vand.u32 %v681, 32767
        %v690 = vand.u32 %v682, 32767
        %v691 = vand.u32 %v683, 32767
        %v692 = vshll.u32 %v688, 16
        %v693 = vshll.u32 %v689, 16
        %v694 = vshll.u32 %v690, 16
        %v695 = vshll.u32 %v691, 16
        %v696 = vadd.s32 %v684, %v692
        %v697 = vadd.s32 %v685, %v693
        %v698 = vadd.s32 %v686, %v694
        %v699 = vadd.s32 %v687, %v695
        %v700 = vmul.u32 %v160, %v674
        %v701 = vmul.u32 %v161, %v674
        %v702 = vmul.u32 %v162, %v674
        %v703 = vmul.u32 %v163, %v674
        %v704 = vshra.s32 %v700, 16
        %v705 = vshra.s32 %v701, 16
        %v706 = vshra.s32 %v702, 16
        %v707 = vshra.s32 %v703, 16
        %v708 = vand.u32 %v700, 65535
        %v709 = vand.u32 %v701, 65535
        %v710 = vand.u32 %v702, 65535
        %v711 = vand.u32 %v703, 65535
        %v712 = vshll.u32 %v708, 15
        %v713 = vshll.u32 %v709, 15
        %v714 = vshll.u32 %v710, 15
        %v715 = vshll.u32 %v711, 15
        %v716 = vadd.s32 %v704, %v712
        %v717 = vadd.s32 %v705, %v713
        %v718 = vadd.s32 %v706, %v714
        %v719 = vadd.s32 %v707, %v715
        %v720 = vmul.u32 %v160, %v679
        %v721 = vmul.u32 %v161, %v679
        %v722 = vmul.u32 %v162, %v679
        %v723 = vmul.u32 %v163, %v679
        %v724 = vsub.s32 2147483647, %v696
        %v725 = vsub.s32 2147483647, %v697
        %v726 = vsub.s32 2147483647, %v698
        %v727 = vsub.s32 2147483647, %v699
        %v728 = vsub.s32 %v675, %v724
        %v729 = vsub.s32 %v676, %v725
        %v730 = vsub.s32 %v677, %v726
        %v731 = vsub.s32 %v678, %v727
        %vm732 = vcmp.lt.s32.totalorder %v728, 0
        %vm733 = vcmp.lt.s32.totalorder %v729, 0
        %vm734 = vcmp.lt.s32.totalorder %v730, 0
        %vm735 = vcmp.lt.s32.totalorder %v731, 0
        %v736 = vadd.s32 %v728, 2147483647
        %v737 = vadd.s32 %v729, 2147483647
        %v738 = vadd.s32 %v730, 2147483647
        %v739 = vadd.s32 %v731, 2147483647
        %v740 = vsel %vm732, %v736, %v728
        %v741 = vsel %vm733, %v737, %v729
        %v742 = vsel %vm734, %v738, %v730
        %v743 = vsel %vm735, %v739, %v731
        %v744 = vsub.s32 2147483647, %v720
        %v745 = vsub.s32 2147483647, %v721
        %v746 = vsub.s32 2147483647, %v722
        %v747 = vsub.s32 2147483647, %v723
        %v748 = vsub.s32 %v716, %v744
        %v749 = vsub.s32 %v717, %v745
        %v750 = vsub.s32 %v718, %v746
        %v751 = vsub.s32 %v719, %v747
        %vm752 = vcmp.lt.s32.totalorder %v748, 0
        %vm753 = vcmp.lt.s32.totalorder %v749, 0
        %vm754 = vcmp.lt.s32.totalorder %v750, 0
        %vm755 = vcmp.lt.s32.totalorder %v751, 0
        %v756 = vadd.s32 %v748, 2147483647
        %v757 = vadd.s32 %v749, 2147483647
        %v758 = vadd.s32 %v750, 2147483647
        %v759 = vadd.s32 %v751, 2147483647
        %v760 = vsel %vm752, %v756, %v748
        %v761 = vsel %vm753, %v757, %v749
        %v762 = vsel %vm754, %v758, %v750
        %v763 = vsel %vm755, %v759, %v751
        %v764 = vsub.s32 2147483647, %v760
        %v765 = vsub.s32 2147483647, %v761
        %v766 = vsub.s32 2147483647, %v762
        %v767 = vsub.s32 2147483647, %v763
        %v768 = vsub.s32 %v740, %v764
        %v769 = vsub.s32 %v741, %v765
        %v770 = vsub.s32 %v742, %v766
        %v771 = vsub.s32 %v743, %v767
        %vm772 = vcmp.lt.s32.totalorder %v768, 0
        %vm773 = vcmp.lt.s32.totalorder %v769, 0
        %vm774 = vcmp.lt.s32.totalorder %v770, 0
        %vm775 = vcmp.lt.s32.totalorder %v771, 0
        %v776 = vadd.s32 %v768, 2147483647
        %v777 = vadd.s32 %v769, 2147483647
        %v778 = vadd.s32 %v770, 2147483647
        %v779 = vadd.s32 %v771, 2147483647
        %v780 = vsel %vm772, %v776, %v768
        %v781 = vsel %vm773, %v777, %v769
        %v782 = vsel %vm774, %v778, %v770
        %v783 = vsel %vm775, %v779, %v771
        %vm784 = vcmp.lt.s32.totalorder %v780, 0
        %v785 = vsub.s32 0, %v780
        %v786 = vsel %vm784, %v785, %v780
        %v787 = vand.u32 %v786, 65535
        %v788 = vshrl.u32 %v786, 16
        %v790 = vmul.u32 %v787, 28312
        %v791 = vmul.u32 %v787, 33554
        %v792 = vmul.u32 %v788, 28312
        %v793 = vmul.u32 %v788, 33554
        %v794 = vshll.u32 %v791, 16
        %v795 = vshrl.u32 %v791, 16
        %v796 = vshll.u32 %v792, 16
        %v797 = vshrl.u32 %v792, 16
        %vm798 = vc.u32 %v790, %v794
        %v799 = vsel %vm798, 1, 0
        %v800 = vadd.s32 %v790, %v794
        %v801 = vadd.s32 %v793, %v799
        %vm802 = vc.u32 %v800, %v796
        %v803 = vsel %vm802, 1, 0
        %v804 = vadd.s32 %v800, %v796
        %v805 = vadd.s32 %v801, %v803
        %v806 = vadd.s32 %v805, %v795
        %v807 = vadd.s32 %v806, %v797
        %v808 = vshrl.u32 %v807, 9
        %v809 = vmul.u32 %v808, 1000
        %v810 = vsub.s32 %v786, %v809
        %v811 = vsub.s32 0, %v810
        %v812 = vsel %vm784, %v811, %v810
        %vm813 = vcmp.lt.s32.totalorder %v781, 0
        %v814 = vsub.s32 0, %v781
        %v815 = vsel %vm813, %v814, %v781
        %v816 = vand.u32 %v815, 65535
        %v817 = vshrl.u32 %v815, 16
        %v819 = vmul.u32 %v816, 28312
        %v820 = vmul.u32 %v816, 33554
        %v821 = vmul.u32 %v817, 28312
        %v822 = vmul.u32 %v817, 33554
        %v823 = vshll.u32 %v820, 16
        %v824 = vshrl.u32 %v820, 16
        %v825 = vshll.u32 %v821, 16
        %v826 = vshrl.u32 %v821, 16
        %vm827 = vc.u32 %v819, %v823
        %v828 = vsel %vm827, 1, 0
        %v829 = vadd.s32 %v819, %v823
        %v830 = vadd.s32 %v822, %v828
        %vm831 = vc.u32 %v829, %v825
        %v832 = vsel %vm831, 1, 0
        %v833 = vadd.s32 %v829, %v825
        %v834 = vadd.s32 %v830, %v832
        %v835 = vadd.s32 %v834, %v824
        %v836 = vadd.s32 %v835, %v826
        %v837 = vshrl.u32 %v836, 9
        %v838 = vmul.u32 %v837, 1000
        %v839 = vsub.s32 %v815, %v838
        %v840 = vsub.s32 0, %v839
        %v841 = vsel %vm813, %v840, %v839
        %vm842 = vcmp.lt.s32.totalorder %v782, 0
        %v843 = vsub.s32 0, %v782
        %v844 = vsel %vm842, %v843, %v782
        %v845 = vand.u32 %v844, 65535
        %v846 = vshrl.u32 %v844, 16
        %v848 = vmul.u32 %v845, 28312
        %v849 = vmul.u32 %v845, 33554
        %v850 = vmul.u32 %v846, 28312
        %v851 = vmul.u32 %v846, 33554
        %v852 = vshll.u32 %v849, 16
        %v853 = vshrl.u32 %v849, 16
        %v854 = vshll.u32 %v850, 16
        %v855 = vshrl.u32 %v850, 16
        %vm856 = vc.u32 %v848, %v852
        %v857 = vsel %vm856, 1, 0
        %v858 = vadd.s32 %v848, %v852
        %v859 = vadd.s32 %v851, %v857
        %vm860 = vc.u32 %v858, %v854
        %v861 = vsel %vm860, 1, 0
        %v862 = vadd.s32 %v858, %v854
        %v863 = vadd.s32 %v859, %v861
        %v864 = vadd.s32 %v863, %v853
        %v865 = vadd.s32 %v864, %v855
        %v866 = vshrl.u32 %v865, 9
        %v867 = vmul.u32 %v866, 1000
        %v868 = vsub.s32 %v844, %v867
        %v869 = vsub.s32 0, %v868
        %v870 = vsel %vm842, %v869, %v868
        %vm871 = vcmp.lt.s32.totalorder %v783, 0
        %v872 = vsub.s32 0, %v783
        %v873 = vsel %vm871, %v872, %v783
        %v874 = vand.u32 %v873, 65535
        %v875 = vshrl.u32 %v873, 16
        %v877 = vmul.u32 %v874, 28312
        %v878 = vmul.u32 %v874, 33554
        %v879 = vmul.u32 %v875, 28312
        %v880 = vmul.u32 %v875, 33554
        %v881 = vshll.u32 %v878, 16
        %v882 = vshrl.u32 %v878, 16
        %v883 = vshll.u32 %v879, 16
        %v884 = vshrl.u32 %v879, 16
        %vm885 = vc.u32 %v877, %v881
        %v886 = vsel %vm885, 1, 0
        %v887 = vadd.s32 %v877, %v881
        %v888 = vadd.s32 %v880, %v886
        %vm889 = vc.u32 %v887, %v883
        %v890 = vsel %vm889, 1, 0
        %v891 = vadd.s32 %v887, %v883
        %v892 = vadd.s32 %v888, %v890
        %v893 = vadd.s32 %v892, %v882
        %v894 = vadd.s32 %v893, %v884
        %v895 = vshrl.u32 %v894, 9
        %v896 = vmul.u32 %v895, 1000
        %v897 = vsub.s32 %v873, %v896
        %v898 = vsub.s32 0, %v897
        %v899 = vsel %vm871, %v898, %v897
        %vm900 = vcmp.ne.s32.totalorder %v812, 0
        %vm901 = vcmp.ne.s32.totalorder %v841, 0
        %vm902 = vcmp.ne.s32.totalorder %v870, 0
        %vm903 = vcmp.ne.s32.totalorder %v899, 0
        %vm904 = vcmp.lt.s32.totalorder %v812, 0
        %vm905 = vcmp.lt.s32.totalorder %v841, 0
        %vm906 = vcmp.lt.s32.totalorder %v870, 0
        %vm907 = vcmp.lt.s32.totalorder %v899, 0
        %vm908 = vmand %vm904, %vm900
        %vm909 = vmand %vm905, %vm901
        %vm910 = vmand %vm906, %vm902
        %vm911 = vmand %vm907, %vm903
        %v912 = vadd.s32 %v812, 1000
        %v913 = vadd.s32 %v841, 1000
        %v914 = vadd.s32 %v870, 1000
        %v915 = vadd.s32 %v899, 1000
        %v916 = vsel %vm908, %v912, %v812
        %v917 = vsel %vm909, %v913, %v841
        %v918 = vsel %vm910, %v914, %v870
        %v919 = vsel %vm911, %v915, %v899
        %s920 = scalar_lea.vmem %s143, 64 [#allocation7]
        %921 = vst [vmem:[%s920] sm:$0xff] %v916
        %922 = vst [vmem:[%s920 + $0x8] sm:$0xff] %v917
        %923 = vst [vmem:[%s920 + $0x10] sm:$0xff] %v918
        %924 = vst [vmem:[%s920 + $0x18] sm:$0xff] %v919
        %s925 = sld [smem:[#allocation3 + $0x3]]
        %s926 = sshra.s32 %s925, 15
        %s927 = sand.u32 %s925, 32767
        %v928 = vstv %s926
        %v929 = vmul.u32 %v156, %v928
        %v930 = vmul.u32 %v157, %v928
        %v931 = vmul.u32 %v158, %v928
        %v932 = vmul.u32 %v159, %v928
        %v933 = vstv %s927
        %v934 = vmul.u32 %v156, %v933
        %v935 = vmul.u32 %v157, %v933
        %v936 = vmul.u32 %v158, %v933
        %v937 = vmul.u32 %v159, %v933
        %v938 = vshra.s32 %v934, 15
        %v939 = vshra.s32 %v935, 15
        %v940 = vshra.s32 %v936, 15
        %v941 = vshra.s32 %v937, 15
        %v942 = vand.u32 %v934, 32767
        %v943 = vand.u32 %v935, 32767
        %v944 = vand.u32 %v936, 32767
        %v945 = vand.u32 %v937, 32767
        %v946 = vshll.u32 %v942, 16
        %v947 = vshll.u32 %v943, 16
        %v948 = vshll.u32 %v944, 16
        %v949 = vshll.u32 %v945, 16
        %v950 = vadd.s32 %v938, %v946
        %v951 = vadd.s32 %v939, %v947
        %v952 = vadd.s32 %v940, %v948
        %v953 = vadd.s32 %v941, %v949
        %v954 = vmul.u32 %v160, %v928
        %v955 = vmul.u32 %v161, %v928
        %v956 = vmul.u32 %v162, %v928
        %v957 = vmul.u32 %v163, %v928
        %v958 = vshra.s32 %v954, 16
        %v959 = vshra.s32 %v955, 16
        %v960 = vshra.s32 %v956, 16
        %v961 = vshra.s32 %v957, 16
        %v962 = vand.u32 %v954, 65535
        %v963 = vand.u32 %v955, 65535
        %v964 = vand.u32 %v956, 65535
        %v965 = vand.u32 %v957, 65535
        %v966 = vshll.u32 %v962, 15
        %v967 = vshll.u32 %v963, 15
        %v968 = vshll.u32 %v964, 15
        %v969 = vshll.u32 %v965, 15
        %v970 = vadd.s32 %v958, %v966
        %v971 = vadd.s32 %v959, %v967
        %v972 = vadd.s32 %v960, %v968
        %v973 = vadd.s32 %v961, %v969
        %v974 = vmul.u32 %v160, %v933
        %v975 = vmul.u32 %v161, %v933
        %v976 = vmul.u32 %v162, %v933
        %v977 = vmul.u32 %v163, %v933
        %v978 = vsub.s32 2147483647, %v950
        %v979 = vsub.s32 2147483647, %v951
        %v980 = vsub.s32 2147483647, %v952
        %v981 = vsub.s32 2147483647, %v953
        %v982 = vsub.s32 %v929, %v978
        %v983 = vsub.s32 %v930, %v979
        %v984 = vsub.s32 %v931, %v980
        %v985 = vsub.s32 %v932, %v981
        %vm986 = vcmp.lt.s32.totalorder %v982, 0
        %vm987 = vcmp.lt.s32.totalorder %v983, 0
        %vm988 = vcmp.lt.s32.totalorder %v984, 0
        %vm989 = vcmp.lt.s32.totalorder %v985, 0
        %v990 = vadd.s32 %v982, 2147483647
        %v991 = vadd.s32 %v983, 2147483647
        %v992 = vadd.s32 %v984, 2147483647
        %v993 = vadd.s32 %v985, 2147483647
        %v994 = vsel %vm986, %v990, %v982
        %v995 = vsel %vm987, %v991, %v983
        %v996 = vsel %vm988, %v992, %v984
        %v997 = vsel %vm989, %v993, %v985
        %v998 = vsub.s32 2147483647, %v974
        %v999 = vsub.s32 2147483647, %v975
        %v1000 = vsub.s32 2147483647, %v976
        %v1001 = vsub.s32 2147483647, %v977
        %v1002 = vsub.s32 %v970, %v998
        %v1003 = vsub.s32 %v971, %v999
        %v1004 = vsub.s32 %v972, %v1000
        %v1005 = vsub.s32 %v973, %v1001
        %vm1006 = vcmp.lt.s32.totalorder %v1002, 0
        %vm1007 = vcmp.lt.s32.totalorder %v1003, 0
        %vm1008 = vcmp.lt.s32.totalorder %v1004, 0
        %vm1009 = vcmp.lt.s32.totalorder %v1005, 0
        %v1010 = vadd.s32 %v1002, 2147483647
        %v1011 = vadd.s32 %v1003, 2147483647
        %v1012 = vadd.s32 %v1004, 2147483647
        %v1013 = vadd.s32 %v1005, 2147483647
        %v1014 = vsel %vm1006, %v1010, %v1002
        %v1015 = vsel %vm1007, %v1011, %v1003
        %v1016 = vsel %vm1008, %v1012, %v1004
        %v1017 = vsel %vm1009, %v1013, %v1005
        %v1018 = vsub.s32 2147483647, %v1014
        %v1019 = vsub.s32 2147483647, %v1015
        %v1020 = vsub.s32 2147483647, %v1016
        %v1021 = vsub.s32 2147483647, %v1017
        %v1022 = vsub.s32 %v994, %v1018
        %v1023 = vsub.s32 %v995, %v1019
        %v1024 = vsub.s32 %v996, %v1020
        %v1025 = vsub.s32 %v997, %v1021
        %vm1026 = vcmp.lt.s32.totalorder %v1022, 0
        %vm1027 = vcmp.lt.s32.totalorder %v1023, 0
        %vm1028 = vcmp.lt.s32.totalorder %v1024, 0
        %vm1029 = vcmp.lt.s32.totalorder %v1025, 0
        %v1030 = vadd.s32 %v1022, 2147483647
        %v1031 = vadd.s32 %v1023, 2147483647
        %v1032 = vadd.s32 %v1024, 2147483647
        %v1033 = vadd.s32 %v1025, 2147483647
        %v1034 = vsel %vm1026, %v1030, %v1022
        %v1035 = vsel %vm1027, %v1031, %v1023
        %v1036 = vsel %vm1028, %v1032, %v1024
        %v1037 = vsel %vm1029, %v1033, %v1025
        %vm1038 = vcmp.lt.s32.totalorder %v1034, 0
        %v1039 = vsub.s32 0, %v1034
        %v1040 = vsel %vm1038, %v1039, %v1034
        %v1041 = vand.u32 %v1040, 65535
        %v1042 = vshrl.u32 %v1040, 16
        %v1044 = vmul.u32 %v1041, 28312
        %v1045 = vmul.u32 %v1041, 33554
        %v1046 = vmul.u32 %v1042, 28312
        %v1047 = vmul.u32 %v1042, 33554
        %v1048 = vshll.u32 %v1045, 16
        %v1049 = vshrl.u32 %v1045, 16
        %v1050 = vshll.u32 %v1046, 16
        %v1051 = vshrl.u32 %v1046, 16
        %vm1052 = vc.u32 %v1044, %v1048
        %v1053 = vsel %vm1052, 1, 0
        %v1054 = vadd.s32 %v1044, %v1048
        %v1055 = vadd.s32 %v1047, %v1053
        %vm1056 = vc.u32 %v1054, %v1050
        %v1057 = vsel %vm1056, 1, 0
        %v1058 = vadd.s32 %v1054, %v1050
        %v1059 = vadd.s32 %v1055, %v1057
        %v1060 = vadd.s32 %v1059, %v1049
        %v1061 = vadd.s32 %v1060, %v1051
        %v1062 = vshrl.u32 %v1061, 9
        %v1063 = vmul.u32 %v1062, 1000
        %v1064 = vsub.s32 %v1040, %v1063
        %v1065 = vsub.s32 0, %v1064
        %v1066 = vsel %vm1038, %v1065, %v1064
        %vm1067 = vcmp.lt.s32.totalorder %v1035, 0
        %v1068 = vsub.s32 0, %v1035
        %v1069 = vsel %vm1067, %v1068, %v1035
        %v1070 = vand.u32 %v1069, 65535
        %v1071 = vshrl.u32 %v1069, 16
        %v1073 = vmul.u32 %v1070, 28312
        %v1074 = vmul.u32 %v1070, 33554
        %v1075 = vmul.u32 %v1071, 28312
        %v1076 = vmul.u32 %v1071, 33554
        %v1077 = vshll.u32 %v1074, 16
        %v1078 = vshrl.u32 %v1074, 16
        %v1079 = vshll.u32 %v1075, 16
        %v1080 = vshrl.u32 %v1075, 16
        %vm1081 = vc.u32 %v1073, %v1077
        %v1082 = vsel %vm1081, 1, 0
        %v1083 = vadd.s32 %v1073, %v1077
        %v1084 = vadd.s32 %v1076, %v1082
        %vm1085 = vc.u32 %v1083, %v1079
        %v1086 = vsel %vm1085, 1, 0
        %v1087 = vadd.s32 %v1083, %v1079
        %v1088 = vadd.s32 %v1084, %v1086
        %v1089 = vadd.s32 %v1088, %v1078
        %v1090 = vadd.s32 %v1089, %v1080
        %v1091 = vshrl.u32 %v1090, 9
        %v1092 = vmul.u32 %v1091, 1000
        %v1093 = vsub.s32 %v1069, %v1092
        %v1094 = vsub.s32 0, %v1093
        %v1095 = vsel %vm1067, %v1094, %v1093
        %vm1096 = vcmp.lt.s32.totalorder %v1036, 0
        %v1097 = vsub.s32 0, %v1036
        %v1098 = vsel %vm1096, %v1097, %v1036
        %v1099 = vand.u32 %v1098, 65535
        %v1100 = vshrl.u32 %v1098, 16
        %v1102 = vmul.u32 %v1099, 28312
        %v1103 = vmul.u32 %v1099, 33554
        %v1104 = vmul.u32 %v1100, 28312
        %v1105 = vmul.u32 %v1100, 33554
        %v1106 = vshll.u32 %v1103, 16
        %v1107 = vshrl.u32 %v1103, 16
        %v1108 = vshll.u32 %v1104, 16
        %v1109 = vshrl.u32 %v1104, 16
        %vm1110 = vc.u32 %v1102, %v1106
        %v1111 = vsel %vm1110, 1, 0
        %v1112 = vadd.s32 %v1102, %v1106
        %v1113 = vadd.s32 %v1105, %v1111
        %vm1114 = vc.u32 %v1112, %v1108
        %v1115 = vsel %vm1114, 1, 0
        %v1116 = vadd.s32 %v1112, %v1108
        %v1117 = vadd.s32 %v1113, %v1115
        %v1118 = vadd.s32 %v1117, %v1107
        %v1119 = vadd.s32 %v1118, %v1109
        %v1120 = vshrl.u32 %v1119, 9
        %v1121 = vmul.u32 %v1120, 1000
        %v1122 = vsub.s32 %v1098, %v1121
        %v1123 = vsub.s32 0, %v1122
        %v1124 = vsel %vm1096, %v1123, %v1122
        %vm1125 = vcmp.lt.s32.totalorder %v1037, 0
        %v1126 = vsub.s32 0, %v1037
        %v1127 = vsel %vm1125, %v1126, %v1037
        %v1128 = vand.u32 %v1127, 65535
        %v1129 = vshrl.u32 %v1127, 16
        %v1131 = vmul.u32 %v1128, 28312
        %v1132 = vmul.u32 %v1128, 33554
        %v1133 = vmul.u32 %v1129, 28312
        %v1134 = vmul.u32 %v1129, 33554
        %v1135 = vshll.u32 %v1132, 16
        %v1136 = vshrl.u32 %v1132, 16
        %v1137 = vshll.u32 %v1133, 16
        %v1138 = vshrl.u32 %v1133, 16
        %vm1139 = vc.u32 %v1131, %v1135
        %v1140 = vsel %vm1139, 1, 0
        %v1141 = vadd.s32 %v1131, %v1135
        %v1142 = vadd.s32 %v1134, %v1140
        %vm1143 = vc.u32 %v1141, %v1137
        %v1144 = vsel %vm1143, 1, 0
        %v1145 = vadd.s32 %v1141, %v1137
        %v1146 = vadd.s32 %v1142, %v1144
        %v1147 = vadd.s32 %v1146, %v1136
        %v1148 = vadd.s32 %v1147, %v1138
        %v1149 = vshrl.u32 %v1148, 9
        %v1150 = vmul.u32 %v1149, 1000
        %v1151 = vsub.s32 %v1127, %v1150
        %v1152 = vsub.s32 0, %v1151
        %v1153 = vsel %vm1125, %v1152, %v1151
        %vm1154 = vcmp.ne.s32.totalorder %v1066, 0
        %vm1155 = vcmp.ne.s32.totalorder %v1095, 0
        %vm1156 = vcmp.ne.s32.totalorder %v1124, 0
        %vm1157 = vcmp.ne.s32.totalorder %v1153, 0
        %vm1158 = vcmp.lt.s32.totalorder %v1066, 0
        %vm1159 = vcmp.lt.s32.totalorder %v1095, 0
        %vm1160 = vcmp.lt.s32.totalorder %v1124, 0
        %vm1161 = vcmp.lt.s32.totalorder %v1153, 0
        %vm1162 = vmand %vm1158, %vm1154
        %vm1163 = vmand %vm1159, %vm1155
        %vm1164 = vmand %vm1160, %vm1156
        %vm1165 = vmand %vm1161, %vm1157
        %v1166 = vadd.s32 %v1066, 1000
        %v1167 = vadd.s32 %v1095, 1000
        %v1168 = vadd.s32 %v1124, 1000
        %v1169 = vadd.s32 %v1153, 1000
        %v1170 = vsel %vm1162, %v1166, %v1066
        %v1171 = vsel %vm1163, %v1167, %v1095
        %v1172 = vsel %vm1164, %v1168, %v1124
        %v1173 = vsel %vm1165, %v1169, %v1153
        %s1174 = scalar_lea.vmem %s143, 96 [#allocation7]
        %1175 = vst [vmem:[%s1174] sm:$0xff] %v1170
        %1176 = vst [vmem:[%s1174 + $0x8] sm:$0xff] %v1171
        %1177 = vst [vmem:[%s1174 + $0x10] sm:$0xff] %v1172
        %1178 = vst [vmem:[%s1174 + $0x18] sm:$0xff] %v1173
        %s1179 = sand.u32 %s61, 1
        %s1180 = scalar_lea.sflag [#allocation6], %s1179
        %s1181 = sand.u32 %s61, 1
        %s1182 = smul.addr %s1181, 128
        %s1183 = scalar_lea.vmem [#allocation7], %s1182
        // Predicated region
        $region29: #{tpu_custom_call.1} parent=23 // pred_check
          %p1184 = pneg %p71
        $region30: #{tpu_custom_call.1} parent=23 // pred_check_branch
          %1186 = sbr.rel (%p1184) target = $region32
        $region31: #{tpu_custom_call.1} parent=23 // pred_region
          %1188 = vsyncadd %s1180, 0
          %s1189 = smul.addr %s27, 4
          %s1190 = smul.addr %s1189, 8
          %s1191 = scalar_lea.hbm %s2, %s1190
          %s1192 = sshll.u32 %s1183, 4
          %s1193 = int_to_ptr.vmem [resolvable:$true] %s1192
          %s1194 = sshll.u32 %s1191, 4
          %s1195 = int_to_ptr.hbm [resolvable:$true] %s1194
          %1200 = dma.vmem_to_hbm [thread:$0]  %s1193, 2048, %s1195, %s1180, 512, 1024, 32
        $region32: #{tpu_custom_call.1} parent=23 // pred_fallthru
          _
      $region24: #{tpu_custom_call.1} parent=5 // pred_fallthru
        _
      %p1201 = scmp.le.s32.totalorder 2, %s22
      // Predicated region
      $region33: #{tpu_custom_call.1} parent=5 // pred_check
        %p1202 = pneg %p1201
      $region34: #{tpu_custom_call.1} parent=5 // pred_check_branch
        %1204 = sbr.rel (%p1202) target = $region36
      $region35: #{tpu_custom_call.1} parent=5 // pred_region
        %s1205 = ssub.s32 %s22, 2
        // Predicated region
        $region37: #{tpu_custom_call.1} parent=35 // pred_check
          %p1206 = pneg %p77
        $region38: #{tpu_custom_call.1} parent=35 // pred_check_branch
          %1208 = sbr.rel (%p1206) target = $region40
        $region39: #{tpu_custom_call.1} parent=35 // pred_region
          %s1209 = sand.u32 %s62, 1
          %s1210 = scalar_lea.sflag [#allocation6], %s1209
          %s1211 = sand.u32 %s62, 1
          %s1212 = smul.addr %s1211, 128
          %s1213 = scalar_lea.vmem [#allocation7], %s1212
          %1215 = dma.done %s1210, 2048
        $region40: #{tpu_custom_call.1} parent=35 // pred_fallthru
          _
      $region36: #{tpu_custom_call.1} parent=5 // pred_fallthru
        _
    $region6: #{tpu_custom_call.1} parent=1 // loop_footer
      %s26 = sadd.s32 1, %s22
    $region7: #{tpu_custom_call.1} parent=1 // loop_footer_branch
      %21 = sbr.rel target = $region3
    $region8: #{tpu_custom_call.1} parent=1 // loop_exit
      _
    %1216 = vsyncpa [#allocation5], 1
    %s1217 = scalar_lea.sflag [#allocation5], 1
    %1218 = vsyncpa %s1217, 1
    %1219 = vsyncpa [#allocation6], 1
    %s1220 = scalar_lea.sflag [#allocation6], 1
    %1221 = vsyncpa %s1220, 1

</llo_original>
